<compile_context>
chip_gen: v7x
topology: tpu7x:2x2x1
jax: 0.10.0
libtpu: 0.0.40
codegen_flags: <defaults>
</compile_context>

<pallas_src>
import functools
import math

import jax
import jax.numpy as jnp
from jax.experimental import pallas as pl
from jax.experimental.pallas import tpu as pltpu


def _layer_norm(v, g, b, eps=1e-5):
    mu = jnp.mean(v, axis=-1, keepdims=True)
    var = jnp.mean((v - mu) ** 2, axis=-1, keepdims=True)
    return (v - mu) * jax.lax.rsqrt(var + eps) * g + b


def cross_attn_encoder_kernel(q_ref, kv_ref,
                              wq_ref, bq_ref, wkv_ref, bkv_ref,
                              wo_ref, bo_ref,
                              w1_ref, b1_ref, w2_ref, b2_ref,
                              g1_ref, be1_ref, g2_ref, be2_ref,
                              out_ref, attn_ref, *, nhead):
    f32 = jnp.float32
    bf16 = jnp.bfloat16
    B, L, E = q_ref.shape
    S = kv_ref.shape[1]
    dh = E // nhead
    BH = B * nhead
    scale = 1.0 / math.sqrt(dh)

    x = q_ref[...].astype(f32)                       # (B, L, E)
    kv = kv_ref[...].astype(f32)                     # (B, S, E)
    x2d = x.reshape(B * L, E)                        # rows are (batch, seq)-major

    # ---- head-batched in-projection (batch dim = B*nhead) -------------------
    # Weights arrive per-head as (nhead, E, dh) / (nhead, E, 2*dh) bf16 stacks
    # (prepared in the wrapper), so no lane-axis slicing or concat is needed.
    xb = jnp.broadcast_to(x[:, None].astype(bf16), (B, nhead, L, E)).reshape(BH, L, E)
    kvb = jnp.broadcast_to(kv[:, None].astype(bf16), (B, nhead, S, E)).reshape(BH, S, E)
    wq = jnp.broadcast_to(wq_ref[...][None], (B, nhead, E, dh)).reshape(BH, E, dh)
    wkv = jnp.broadcast_to(wkv_ref[...][None], (B, nhead, E, 2 * dh)).reshape(BH, E, 2 * dh)
    bq = jnp.broadcast_to(bq_ref[...][None], (B, nhead, 1, dh)).reshape(BH, 1, dh)
    bkv = jnp.broadcast_to(bkv_ref[...][None], (B, nhead, 1, 2 * dh)).reshape(BH, 1, 2 * dh)

    qh = jnp.einsum('ble,bed->bld', xb, wq, preferred_element_type=f32) + bq        # (BH, L, dh)
    kvh = jnp.einsum('bse,bed->bsd', kvb, wkv, preferred_element_type=f32) + bkv    # (BH, S, 2dh)
    kh = kvh[:, :, :dh]
    vh = kvh[:, :, dh:]

    # ---- attention: one batched matmul for scores, one for P@V --------------
    s = jnp.einsum('bld,bsd->bls', (qh * scale).astype(bf16), kh.astype(bf16),
                   preferred_element_type=f32)                                      # (BH, L, S)
    s = s - jnp.max(s, axis=-1, keepdims=True)
    p = jnp.exp(s)
    p = p * pl.reciprocal(jnp.sum(p, axis=-1, keepdims=True), approx=True)
    o = jnp.einsum('bls,bsd->bld', p.astype(bf16), vh.astype(bf16),
                   preferred_element_type=f32)                                      # (BH, L, dh)

    # mean-over-heads attention map (PyTorch average_attn_weights=True)
    attn_ref[...] = jnp.mean(p.reshape(B, nhead, L, S), axis=1).astype(attn_ref.dtype)

    # ---- output projection: sum over per-head slabs (no lane concat) --------
    o4 = o.reshape(B, nhead, L, dh)
    attn_out = bo_ref[...] + jnp.zeros((B * L, E), f32)
    for h in range(nhead):
        o_h = o4[:, h].reshape(B * L, dh).astype(bf16)
        attn_out = attn_out + jnp.dot(o_h, wo_ref[h], preferred_element_type=f32)

    # ---- residual + norm1 (dropout1 = identity in eval) ---------------------
    q1 = _layer_norm(x2d + attn_out, g1_ref[...], be1_ref[...])

    # ---- FFN: linear2(relu(linear1(q1)))  (dropout = identity in eval) ------
    h1 = jnp.dot(q1.astype(bf16), w1_ref[...], preferred_element_type=f32) + b1_ref[...]
    h1 = jnp.maximum(h1, 0.0)
    h2 = jnp.dot(h1.astype(bf16), w2_ref[...], preferred_element_type=f32) + b2_ref[...]

    # ---- residual + norm2 (dropout2 = identity in eval) ---------------------
    q2 = _layer_norm(q1 + h2, g2_ref[...], be2_ref[...])
    out_ref[...] = q2.reshape(B, L, E).astype(out_ref.dtype)


def init_params(key, d_model):
    """Deterministic synthetic parameters (shapes match the PyTorch module).

    NOTE: weights are stored in right-multiply layout (transposed vs. PyTorch's
    nn.Linear / in_proj weights).  Real PyTorch weights must be transposed first.
    """
    E = d_model
    ks = jax.random.split(key, 8)
    s = 1.0 / math.sqrt(E)
    u = lambda k, shape: jax.random.uniform(k, shape, jnp.float32, -s, s)
    params = dict(
        wq=u(ks[0], (E, E)), wk=u(ks[1], (E, E)), wv=u(ks[2], (E, E)),
        bq=u(ks[3], (1, E)), bk=u(ks[4], (1, E)), bv=u(ks[5], (1, E)),
        wo=u(ks[6], (E, E)), bo=jnp.zeros((1, E), jnp.float32),
        w1=u(ks[7], (E, E)), b1=jnp.zeros((1, E), jnp.float32),
        w2=u(jax.random.fold_in(key, 99), (E, E)), b2=jnp.zeros((1, E), jnp.float32),
        g1=jnp.ones((1, E), jnp.float32), be1=jnp.zeros((1, E), jnp.float32),
        g2=jnp.ones((1, E), jnp.float32), be2=jnp.zeros((1, E), jnp.float32),
    )
    return params


def _pick_batch_block(n, rows_per_batch, target_rows=512):
    """Largest divisor of n whose block packs at most ~target_rows rows."""
    best = 1
    for d in range(1, n + 1):
        if n % d == 0 and d * rows_per_batch <= target_rows:
            best = d
    return best


def cross_attention_encoder_layer(Q, KV, params, nhead):
    """Q: (L, N, E), KV: (S, N, E)  ->  (Q_out: (L, N, E), attn_map: (N, L, S))."""
    L, N, E = Q.shape
    S = KV.shape[0]
    dh = E // nhead
    bf16 = jnp.bfloat16

    qb = jnp.transpose(Q, (1, 0, 2))    # (N, L, E)
    kvb = jnp.transpose(KV, (1, 0, 2))  # (N, S, E)
    # TODO(synk): the seq-first <-> batch-first transposes could be removed by keeping a
    # batch-first layout end-to-end; kept here as plain XLA ops for lowering simplicity.

    # Per-head weight stacks (host-side reorg, done once per call; right-multiply layout).
    split_w = lambda w: jnp.transpose(w.reshape(E, nhead, dh), (1, 0, 2))   # (nhead, E, dh)
    split_b = lambda b: b.reshape(nhead, 1, dh)                             # (nhead, 1, dh)

    wq_h = split_w(params["wq"]).astype(bf16)
    wkv_h = jnp.concatenate([split_w(params["wk"]), split_w(params["wv"])],
                            axis=2).astype(bf16)                            # (nhead, E, 2dh)
    bq_h = split_b(params["bq"]).astype(jnp.float32)
    bkv_h = jnp.concatenate([split_b(params["bk"]), split_b(params["bv"])],
                            axis=2).astype(jnp.float32)                     # (nhead, 1, 2dh)
    wo_h = params["wo"].reshape(nhead, dh, E).astype(bf16)                  # (nhead, dh, E)

    param_list = [
        wq_h, bq_h, wkv_h, bkv_h, wo_h, params["bo"],
        params["w1"].astype(bf16), params["b1"],
        params["w2"].astype(bf16), params["b2"],
        params["g1"], params["be1"], params["g2"], params["be2"],
    ]

    b_blk = _pick_batch_block(N, max(L, S))
    grid = (N // b_blk,)

    def batch_spec(seq, feat):
        return pl.BlockSpec((b_blk, seq, feat), lambda b: (b, 0, 0))

    def const_spec(shape):
        return pl.BlockSpec(shape, lambda b, _n=len(shape): (0,) * _n)

    in_specs = ([batch_spec(L, E), batch_spec(S, E)]
                + [const_spec(p.shape) for p in param_list])
    out_specs = [batch_spec(L, E), batch_spec(L, S)]
    out_shape = (jax.ShapeDtypeStruct((N, L, E), jnp.float32),
                 jax.ShapeDtypeStruct((N, L, S), jnp.float32))

    kernel = functools.partial(cross_attn_encoder_kernel, nhead=nhead)
    out, attn = pl.pallas_call(
        kernel,
        grid=grid,
        in_specs=in_specs,
        out_specs=out_specs,
        out_shape=out_shape,
        compiler_params=pltpu.CompilerParams(dimension_semantics=("parallel",)),
    )(qb, kvb, *param_list)

    return jnp.transpose(out, (1, 0, 2)), attn


def reference(Q, KV, params, nhead):
    """Pure-JAX f32 reference of the PyTorch forward (eval mode)."""
    L, N, E = Q.shape
    S = KV.shape[0]
    dh = E // nhead
    x = jnp.transpose(Q, (1, 0, 2))     # (N, L, E)
    kv = jnp.transpose(KV, (1, 0, 2))   # (N, S, E)
    p = params
    qp = x @ p["wq"] + p["bq"]
    kp = kv @ p["wk"] + p["bk"]
    vp = kv @ p["wv"] + p["bv"]
    qh = qp.reshape(N, L, nhead, dh).transpose(0, 2, 1, 3) / math.sqrt(dh)
    kh = kp.reshape(N, S, nhead, dh).transpose(0, 2, 1, 3)
    vh = vp.reshape(N, S, nhead, dh).transpose(0, 2, 1, 3)
    scores = jnp.einsum("nhld,nhsd->nhls", qh, kh)
    w = jax.nn.softmax(scores, axis=-1)
    o = jnp.einsum("nhls,nhsd->nhld", w, vh).transpose(0, 2, 1, 3).reshape(N, L, E)
    o = o @ p["wo"] + p["bo"]
    q1 = _layer_norm(x + o, p["g1"], p["be1"])
    ff = jnp.maximum(q1 @ p["w1"] + p["b1"], 0.0) @ p["w2"] + p["b2"]
    q2 = _layer_norm(q1 + ff, p["g2"], p["be2"])
    return jnp.transpose(q2, (1, 0, 2)), jnp.mean(w, axis=1)


if __name__ == "__main__":
    d_model, nhead = 32, 4
    L, S, N = 8, 8, 2

    key = jax.random.PRNGKey(0)
    k_q, k_kv, k_p = jax.random.split(key, 3)
    Q = jax.random.normal(k_q, (L, N, d_model), jnp.float32)
    KV = jax.random.normal(k_kv, (S, N, d_model), jnp.float32)
    params = init_params(k_p, d_model)

    out, attn_map = cross_attention_encoder_layer(Q, KV, params, nhead)
    out = jax.block_until_ready(out)
    attn_map = jax.block_until_ready(attn_map)

    ref_out, ref_attn = reference(Q, KV, params, nhead)
    assert out.shape == (L, N, d_model) and attn_map.shape == (N, L, S)
    assert jnp.allclose(out, ref_out, atol=2e-2, rtol=2e-2)
    assert jnp.allclose(attn_map, ref_attn, atol=2e-2, rtol=2e-2)

    print("KERNEL_OK")
</pallas_src>

<mosaic_0001>
module attributes {stable_mosaic.version = 11 : i64} {
  func.func @cross_attn_encoder_kernel(%arg0: i32, %arg1: memref<2x8x32xf32, #tpu.memory_space<vmem>>, %arg2: memref<2x8x32xf32, #tpu.memory_space<vmem>>, %arg3: memref<4x32x8xbf16, #tpu.memory_space<vmem>>, %arg4: memref<4x1x8xf32, #tpu.memory_space<vmem>>, %arg5: memref<4x32x16xbf16, #tpu.memory_space<vmem>>, %arg6: memref<4x1x16xf32, #tpu.memory_space<vmem>>, %arg7: memref<4x8x32xbf16, #tpu.memory_space<vmem>>, %arg8: memref<1x32xf32, #tpu.memory_space<vmem>>, %arg9: memref<32x32xbf16, #tpu.memory_space<vmem>>, %arg10: memref<1x32xf32, #tpu.memory_space<vmem>>, %arg11: memref<32x32xbf16, #tpu.memory_space<vmem>>, %arg12: memref<1x32xf32, #tpu.memory_space<vmem>>, %arg13: memref<1x32xf32, #tpu.memory_space<vmem>>, %arg14: memref<1x32xf32, #tpu.memory_space<vmem>>, %arg15: memref<1x32xf32, #tpu.memory_space<vmem>>, %arg16: memref<1x32xf32, #tpu.memory_space<vmem>>, %arg17: memref<2x8x32xf32, #tpu.memory_space<vmem>>, %arg18: memref<2x8x8xf32, #tpu.memory_space<vmem>>) attributes {dimension_semantics = [#tpu.dimension_semantics<parallel>], iteration_bounds = array<i64: 1>, scalar_prefetch = 0 : i64, scratch_operands = 0 : i64, tpu.core_type = #tpu.core_type<tc>, window_params = [{transform_indices = @transform_0, window_bounds = array<i64: 2, 8, 32>}, {transform_indices = @transform_1, window_bounds = array<i64: 2, 8, 32>}, {pipeline_mode = #tpu.pipeline_mode<synchronous>, transform_indices = @transform_2, window_bounds = array<i64: 4, 32, 8>}, {pipeline_mode = #tpu.pipeline_mode<synchronous>, transform_indices = @transform_3, window_bounds = array<i64: 4, 1, 8>}, {pipeline_mode = #tpu.pipeline_mode<synchronous>, transform_indices = @transform_4, window_bounds = array<i64: 4, 32, 16>}, {pipeline_mode = #tpu.pipeline_mode<synchronous>, transform_indices = @transform_5, window_bounds = array<i64: 4, 1, 16>}, {pipeline_mode = #tpu.pipeline_mode<synchronous>, transform_indices = @transform_6, window_bounds = array<i64: 4, 8, 32>}, {pipeline_mode = #tpu.pipeline_mode<synchronous>, transform_indices = @transform_7, window_bounds = array<i64: 1, 32>}, {pipeline_mode = #tpu.pipeline_mode<synchronous>, transform_indices = @transform_8, window_bounds = array<i64: 32, 32>}, {pipeline_mode = #tpu.pipeline_mode<synchronous>, transform_indices = @transform_9, window_bounds = array<i64: 1, 32>}, {pipeline_mode = #tpu.pipeline_mode<synchronous>, transform_indices = @transform_10, window_bounds = array<i64: 32, 32>}, {pipeline_mode = #tpu.pipeline_mode<synchronous>, transform_indices = @transform_11, window_bounds = array<i64: 1, 32>}, {pipeline_mode = #tpu.pipeline_mode<synchronous>, transform_indices = @transform_12, window_bounds = array<i64: 1, 32>}, {pipeline_mode = #tpu.pipeline_mode<synchronous>, transform_indices = @transform_13, window_bounds = array<i64: 1, 32>}, {pipeline_mode = #tpu.pipeline_mode<synchronous>, transform_indices = @transform_14, window_bounds = array<i64: 1, 32>}, {pipeline_mode = #tpu.pipeline_mode<synchronous>, transform_indices = @transform_15, window_bounds = array<i64: 1, 32>}, {transform_indices = @transform_16, window_bounds = array<i64: 2, 8, 32>}, {transform_indices = @transform_17, window_bounds = array<i64: 2, 8, 8>}]} {
    %c0 = arith.constant 0 : index
    %c0_0 = arith.constant 0 : index
    %c0_1 = arith.constant 0 : index
    %0 = vector.load %arg1[%c0, %c0_0, %c0_1] : memref<2x8x32xf32, #tpu.memory_space<vmem>>, vector<2x8x32xf32>
    %c0_2 = arith.constant 0 : index
    %c0_3 = arith.constant 0 : index
    %c0_4 = arith.constant 0 : index
    %1 = vector.load %arg2[%c0_2, %c0_3, %c0_4] : memref<2x8x32xf32, #tpu.memory_space<vmem>>, vector<2x8x32xf32>
    %2 = vector.shape_cast %0 : vector<2x8x32xf32> to vector<16x32xf32>
    %3 = vector.shape_cast %0 : vector<2x8x32xf32> to vector<2x1x8x32xf32>
    %4 = arith.truncf %3 : vector<2x1x8x32xf32> to vector<2x1x8x32xbf16>
    %5 = vector.shape_cast %4 : vector<2x1x8x32xbf16> to vector<2x1x8x32xbf16>
    %6 = vector.broadcast %5 : vector<2x1x8x32xbf16> to vector<2x4x8x32xbf16>
    %7 = vector.shape_cast %6 : vector<2x4x8x32xbf16> to vector<8x8x32xbf16>
    %8 = vector.shape_cast %1 : vector<2x8x32xf32> to vector<2x1x8x32xf32>
    %9 = arith.truncf %8 : vector<2x1x8x32xf32> to vector<2x1x8x32xbf16>
    %10 = vector.shape_cast %9 : vector<2x1x8x32xbf16> to vector<2x1x8x32xbf16>
    %11 = vector.broadcast %10 : vector<2x1x8x32xbf16> to vector<2x4x8x32xbf16>
    %12 = vector.shape_cast %11 : vector<2x4x8x32xbf16> to vector<8x8x32xbf16>
    %c0_5 = arith.constant 0 : index
    %c0_6 = arith.constant 0 : index
    %c0_7 = arith.constant 0 : index
    %13 = vector.load %arg3[%c0_5, %c0_6, %c0_7] : memref<4x32x8xbf16, #tpu.memory_space<vmem>>, vector<4x32x8xbf16>
    %14 = vector.shape_cast %13 : vector<4x32x8xbf16> to vector<1x4x32x8xbf16>
    %15 = vector.shape_cast %14 : vector<1x4x32x8xbf16> to vector<1x4x32x8xbf16>
    %16 = vector.broadcast %15 : vector<1x4x32x8xbf16> to vector<2x4x32x8xbf16>
    %17 = vector.shape_cast %16 : vector<2x4x32x8xbf16> to vector<8x32x8xbf16>
    %c0_8 = arith.constant 0 : index
    %c0_9 = arith.constant 0 : index
    %c0_10 = arith.constant 0 : index
    %18 = vector.load %arg5[%c0_8, %c0_9, %c0_10] : memref<4x32x16xbf16, #tpu.memory_space<vmem>>, vector<4x32x16xbf16>
    %19 = vector.shape_cast %18 : vector<4x32x16xbf16> to vector<1x4x32x16xbf16>
    %20 = vector.shape_cast %19 : vector<1x4x32x16xbf16> to vector<1x4x32x16xbf16>
    %21 = vector.broadcast %20 : vector<1x4x32x16xbf16> to vector<2x4x32x16xbf16>
    %22 = vector.shape_cast %21 : vector<2x4x32x16xbf16> to vector<8x32x16xbf16>
    %c0_11 = arith.constant 0 : index
    %c0_12 = arith.constant 0 : index
    %c0_13 = arith.constant 0 : index
    %23 = vector.load %arg4[%c0_11, %c0_12, %c0_13] : memref<4x1x8xf32, #tpu.memory_space<vmem>>, vector<4x1x8xf32>
    %24 = vector.shape_cast %23 : vector<4x1x8xf32> to vector<1x4x1x8xf32>
    %25 = vector.shape_cast %24 : vector<1x4x1x8xf32> to vector<1x4x1x8xf32>
    %26 = vector.broadcast %25 : vector<1x4x1x8xf32> to vector<2x4x1x8xf32>
    %27 = vector.shape_cast %26 : vector<2x4x1x8xf32> to vector<8x1x8xf32>
    %c0_14 = arith.constant 0 : index
    %c0_15 = arith.constant 0 : index
    %c0_16 = arith.constant 0 : index
    %28 = vector.load %arg6[%c0_14, %c0_15, %c0_16] : memref<4x1x16xf32, #tpu.memory_space<vmem>>, vector<4x1x16xf32>
    %29 = vector.shape_cast %28 : vector<4x1x16xf32> to vector<1x4x1x16xf32>
    %30 = vector.shape_cast %29 : vector<1x4x1x16xf32> to vector<1x4x1x16xf32>
    %31 = vector.broadcast %30 : vector<1x4x1x16xf32> to vector<2x4x1x16xf32>
    %32 = vector.shape_cast %31 : vector<2x4x1x16xf32> to vector<8x1x16xf32>
    "tpu.trace_start"() <{level = 10 : i32, message = "ble,bed->bld"}> : () -> ()
    %cst = arith.constant dense<0.000000e+00> : vector<8x8x8xf32>
    %33 = tpu.matmul %7, %17, %cst {dimension_numbers = #tpu.dot_dimension_numbers<[2], [1], [1], [2], [0, 0, 0, 1, 1, 2], [0], [0]>} : vector<8x8x32xbf16>, vector<8x32x8xbf16>, vector<8x8x8xf32> -> vector<8x8x8xf32>
    "tpu.trace_stop"() : () -> ()
    %34 = vector.broadcast %27 : vector<8x1x8xf32> to vector<8x8x8xf32>
    %35 = arith.addf %33, %34 : vector<8x8x8xf32>
    "tpu.trace_start"() <{level = 10 : i32, message = "bse,bed->bsd"}> : () -> ()
    %cst_17 = arith.constant dense<0.000000e+00> : vector<8x8x16xf32>
    %36 = tpu.matmul %12, %22, %cst_17 {dimension_numbers = #tpu.dot_dimension_numbers<[2], [1], [1], [2], [0, 0, 0, 1, 1, 2], [0], [0]>} : vector<8x8x32xbf16>, vector<8x32x16xbf16>, vector<8x8x16xf32> -> vector<8x8x16xf32>
    "tpu.trace_stop"() : () -> ()
    %37 = vector.broadcast %32 : vector<8x1x16xf32> to vector<8x8x16xf32>
    %38 = arith.addf %36, %37 : vector<8x8x16xf32>
    %39 = vector.extract_strided_slice %38 {offsets = [0, 0, 0], sizes = [8, 8, 8], strides = [1, 1, 1]} : vector<8x8x16xf32> to vector<8x8x8xf32>
    %40 = vector.extract_strided_slice %38 {offsets = [0, 0, 8], sizes = [8, 8, 8], strides = [1, 1, 1]} : vector<8x8x16xf32> to vector<8x8x8xf32>
    %cst_18 = arith.constant 0.353553385 : f32
    %41 = vector.broadcast %cst_18 : f32 to vector<8x8x8xf32>
    %42 = arith.mulf %35, %41 : vector<8x8x8xf32>
    %43 = arith.truncf %42 : vector<8x8x8xf32> to vector<8x8x8xbf16>
    %44 = arith.truncf %39 : vector<8x8x8xf32> to vector<8x8x8xbf16>
    "tpu.trace_start"() <{level = 10 : i32, message = "bld,bsd->bls"}> : () -> ()
    %cst_19 = arith.constant dense<0.000000e+00> : vector<8x8x8xf32>
    %45 = tpu.matmul %43, %44, %cst_19 {dimension_numbers = #tpu.dot_dimension_numbers<[2], [2], [1], [1], [0, 0, 0, 1, 1, 1], [0], [0]>} : vector<8x8x8xbf16>, vector<8x8x8xbf16>, vector<8x8x8xf32> -> vector<8x8x8xf32>
    "tpu.trace_stop"() : () -> ()
    %cst_20 = arith.constant dense<0xFF800000> : vector<8x8xf32>
    %46 = vector.multi_reduction <maximumf>, %45, %cst_20 [2] : vector<8x8x8xf32> to vector<8x8xf32>
    %47 = vector.shape_cast %46 : vector<8x8xf32> to vector<8x8x1xf32>
    %48 = vector.broadcast %47 : vector<8x8x1xf32> to vector<8x8x8xf32>
    %49 = arith.subf %45, %48 : vector<8x8x8xf32>
    %50 = math.exp %49 : vector<8x8x8xf32>
    %cst_21 = arith.constant dense<0.000000e+00> : vector<8x8xf32>
    %51 = vector.multi_reduction <add>, %50, %cst_21 [2] : vector<8x8x8xf32> to vector<8x8xf32>
    %52 = vector.shape_cast %51 : vector<8x8xf32> to vector<8x8x1xf32>
    %53 = tpu.reciprocal %52 {approx = true} : vector<8x8x1xf32> -> vector<8x8x1xf32>
    %54 = vector.broadcast %53 : vector<8x8x1xf32> to vector<8x8x8xf32>
    %55 = arith.mulf %50, %54 : vector<8x8x8xf32>
    %56 = arith.truncf %55 : vector<8x8x8xf32> to vector<8x8x8xbf16>
    %57 = arith.truncf %40 : vector<8x8x8xf32> to vector<8x8x8xbf16>
    "tpu.trace_start"() <{level = 10 : i32, message = "bls,bsd->bld"}> : () -> ()
    %cst_22 = arith.constant dense<0.000000e+00> : vector<8x8x8xf32>
    %58 = tpu.matmul %56, %57, %cst_22 {dimension_numbers = #tpu.dot_dimension_numbers<[2], [1], [1], [2], [0, 0, 0, 1, 1, 2], [0], [0]>} : vector<8x8x8xbf16>, vector<8x8x8xbf16>, vector<8x8x8xf32> -> vector<8x8x8xf32>
    "tpu.trace_stop"() : () -> ()
    %59 = vector.shape_cast %55 : vector<8x8x8xf32> to vector<2x4x8x8xf32>
    %cst_23 = arith.constant dense<0.000000e+00> : vector<2x8x8xf32>
    %60 = vector.multi_reduction <add>, %59, %cst_23 [1] : vector<2x4x8x8xf32> to vector<2x8x8xf32>
    %cst_24 = arith.constant 4.000000e+00 : f32
    %61 = vector.broadcast %cst_24 : f32 to vector<2x8x8xf32>
    %62 = arith.divf %60, %61 : vector<2x8x8xf32>
    %c0_25 = arith.constant 0 : index
    %c0_26 = arith.constant 0 : index
    %c0_27 = arith.constant 0 : index
    %63 = vector.load %arg18[%c0_25, %c0_26, %c0_27] : memref<2x8x8xf32, #tpu.memory_space<vmem>>, vector<2x8x8xf32>
    tpu.vector_store %arg18[%c0_25, %c0_26, %c0_27], %62 {strides = array<i32>} : memref<2x8x8xf32, #tpu.memory_space<vmem>>, vector<2x8x8xf32>,
    %64 = vector.shape_cast %58 : vector<8x8x8xf32> to vector<2x4x8x8xf32>
    %c0_28 = arith.constant 0 : index
    %c0_29 = arith.constant 0 : index
    %65 = vector.load %arg8[%c0_28, %c0_29] : memref<1x32xf32, #tpu.memory_space<vmem>>, vector<1x32xf32>
    %cst_30 = arith.constant 0.000000e+00 : f32
    %66 = vector.broadcast %cst_30 : f32 to vector<16x32xf32>
    %67 = vector.broadcast %65 : vector<1x32xf32> to vector<16x32xf32>
    %68 = arith.addf %67, %66 : vector<16x32xf32>
    %69 = vector.extract_strided_slice %64 {offsets = [0, 0, 0, 0], sizes = [2, 1, 8, 8], strides = [1, 1, 1, 1]} : vector<2x4x8x8xf32> to vector<2x1x8x8xf32>
    %70 = vector.shape_cast %69 : vector<2x1x8x8xf32> to vector<2x8x8xf32>
    %71 = vector.shape_cast %70 : vector<2x8x8xf32> to vector<16x8xf32>
    %72 = arith.truncf %71 : vector<16x8xf32> to vector<16x8xbf16>
    %c0_31 = arith.constant 0 : index
    %c0_32 = arith.constant 0 : index
    %c0_33 = arith.constant 0 : index
    %73 = vector.load %arg7[%c0_31, %c0_32, %c0_33] : memref<4x8x32xbf16, #tpu.memory_space<vmem>>, vector<1x8x32xbf16>
    %74 = vector.shape_cast %73 : vector<1x8x32xbf16> to vector<8x32xbf16>
    %cst_34 = arith.constant dense<0.000000e+00> : vector<16x32xf32>
    %75 = tpu.matmul %72, %74, %cst_34 {dimension_numbers = #tpu.dot_dimension_numbers<[1], [0], [0], [1], [0, 0, 1, 1], [], []>} : vector<16x8xbf16>, vector<8x32xbf16>, vector<16x32xf32> -> vector<16x32xf32>
    %76 = arith.addf %68, %75 : vector<16x32xf32>
    %77 = vector.extract_strided_slice %64 {offsets = [0, 1, 0, 0], sizes = [2, 1, 8, 8], strides = [1, 1, 1, 1]} : vector<2x4x8x8xf32> to vector<2x1x8x8xf32>
    %78 = vector.shape_cast %77 : vector<2x1x8x8xf32> to vector<2x8x8xf32>
    %79 = vector.shape_cast %78 : vector<2x8x8xf32> to vector<16x8xf32>
    %80 = arith.truncf %79 : vector<16x8xf32> to vector<16x8xbf16>
    %c1 = arith.constant 1 : index
    %c0_35 = arith.constant 0 : index
    %c0_36 = arith.constant 0 : index
    %81 = vector.load %arg7[%c1, %c0_35, %c0_36] : memref<4x8x32xbf16, #tpu.memory_space<vmem>>, vector<1x8x32xbf16>
    %82 = vector.shape_cast %81 : vector<1x8x32xbf16> to vector<8x32xbf16>
    %cst_37 = arith.constant dense<0.000000e+00> : vector<16x32xf32>
    %83 = tpu.matmul %80, %82, %cst_37 {dimension_numbers = #tpu.dot_dimension_numbers<[1], [0], [0], [1], [0, 0, 1, 1], [], []>} : vector<16x8xbf16>, vector<8x32xbf16>, vector<16x32xf32> -> vector<16x32xf32>
    %84 = arith.addf %76, %83 : vector<16x32xf32>
    %85 = vector.extract_strided_slice %64 {offsets = [0, 2, 0, 0], sizes = [2, 1, 8, 8], strides = [1, 1, 1, 1]} : vector<2x4x8x8xf32> to vector<2x1x8x8xf32>
    %86 = vector.shape_cast %85 : vector<2x1x8x8xf32> to vector<2x8x8xf32>
    %87 = vector.shape_cast %86 : vector<2x8x8xf32> to vector<16x8xf32>
    %88 = arith.truncf %87 : vector<16x8xf32> to vector<16x8xbf16>
    %c2 = arith.constant 2 : index
    %c0_38 = arith.constant 0 : index
    %c0_39 = arith.constant 0 : index
    %89 = vector.load %arg7[%c2, %c0_38, %c0_39] : memref<4x8x32xbf16, #tpu.memory_space<vmem>>, vector<1x8x32xbf16>
    %90 = vector.shape_cast %89 : vector<1x8x32xbf16> to vector<8x32xbf16>
    %cst_40 = arith.constant dense<0.000000e+00> : vector<16x32xf32>
    %91 = tpu.matmul %88, %90, %cst_40 {dimension_numbers = #tpu.dot_dimension_numbers<[1], [0], [0], [1], [0, 0, 1, 1], [], []>} : vector<16x8xbf16>, vector<8x32xbf16>, vector<16x32xf32> -> vector<16x32xf32>
    %92 = arith.addf %84, %91 : vector<16x32xf32>
    %93 = vector.extract_strided_slice %64 {offsets = [0, 3, 0, 0], sizes = [2, 1, 8, 8], strides = [1, 1, 1, 1]} : vector<2x4x8x8xf32> to vector<2x1x8x8xf32>
    %94 = vector.shape_cast %93 : vector<2x1x8x8xf32> to vector<2x8x8xf32>
    %95 = vector.shape_cast %94 : vector<2x8x8xf32> to vector<16x8xf32>
    %96 = arith.truncf %95 : vector<16x8xf32> to vector<16x8xbf16>
    %c3 = arith.constant 3 : index
    %c0_41 = arith.constant 0 : index
    %c0_42 = arith.constant 0 : index
    %97 = vector.load %arg7[%c3, %c0_41, %c0_42] : memref<4x8x32xbf16, #tpu.memory_space<vmem>>, vector<1x8x32xbf16>
    %98 = vector.shape_cast %97 : vector<1x8x32xbf16> to vector<8x32xbf16>
    %cst_43 = arith.constant dense<0.000000e+00> : vector<16x32xf32>
    %99 = tpu.matmul %96, %98, %cst_43 {dimension_numbers = #tpu.dot_dimension_numbers<[1], [0], [0], [1], [0, 0, 1, 1], [], []>} : vector<16x8xbf16>, vector<8x32xbf16>, vector<16x32xf32> -> vector<16x32xf32>
    %100 = arith.addf %92, %99 : vector<16x32xf32>
    %101 = arith.addf %2, %100 : vector<16x32xf32>
    %c0_44 = arith.constant 0 : index
    %c0_45 = arith.constant 0 : index
    %102 = vector.load %arg13[%c0_44, %c0_45] : memref<1x32xf32, #tpu.memory_space<vmem>>, vector<1x32xf32>
    %c0_46 = arith.constant 0 : index
    %c0_47 = arith.constant 0 : index
    %103 = vector.load %arg14[%c0_46, %c0_47] : memref<1x32xf32, #tpu.memory_space<vmem>>, vector<1x32xf32>
    %cst_48 = arith.constant dense<0.000000e+00> : vector<16xf32>
    %104 = vector.multi_reduction <add>, %101, %cst_48 [1] : vector<16x32xf32> to vector<16xf32>
    %105 = vector.shape_cast %104 : vector<16xf32> to vector<16x1xf32>
    %cst_49 = arith.constant 3.200000e+01 : f32
    %106 = vector.broadcast %cst_49 : f32 to vector<16x1xf32>
    %107 = arith.divf %105, %106 : vector<16x1xf32>
    %108 = vector.broadcast %107 : vector<16x1xf32> to vector<16x32xf32>
    %109 = arith.subf %101, %108 : vector<16x32xf32>
    %110 = arith.mulf %109, %109 : vector<16x32xf32>
    %cst_50 = arith.constant dense<0.000000e+00> : vector<16xf32>
    %111 = vector.multi_reduction <add>, %110, %cst_50 [1] : vector<16x32xf32> to vector<16xf32>
    %112 = vector.shape_cast %111 : vector<16xf32> to vector<16x1xf32>
    %cst_51 = arith.constant 3.200000e+01 : f32
    %113 = vector.broadcast %cst_51 : f32 to vector<16x1xf32>
    %114 = arith.divf %112, %113 : vector<16x1xf32>
    %115 = vector.broadcast %107 : vector<16x1xf32> to vector<16x32xf32>
    %116 = arith.subf %101, %115 : vector<16x32xf32>
    %cst_52 = arith.constant 9.99999974E-6 : f32
    %117 = vector.broadcast %cst_52 : f32 to vector<16x1xf32>
    %118 = arith.addf %114, %117 : vector<16x1xf32>
    %119 = math.rsqrt %118 : vector<16x1xf32>
    %120 = vector.broadcast %119 : vector<16x1xf32> to vector<16x32xf32>
    %121 = arith.mulf %116, %120 : vector<16x32xf32>
    %122 = vector.broadcast %102 : vector<1x32xf32> to vector<16x32xf32>
    %123 = arith.mulf %121, %122 : vector<16x32xf32>
    %124 = vector.broadcast %103 : vector<1x32xf32> to vector<16x32xf32>
    %125 = arith.addf %123, %124 : vector<16x32xf32>
    %126 = arith.truncf %125 : vector<16x32xf32> to vector<16x32xbf16>
    %c0_53 = arith.constant 0 : index
    %c0_54 = arith.constant 0 : index
    %127 = vector.load %arg9[%c0_53, %c0_54] : memref<32x32xbf16, #tpu.memory_space<vmem>>, vector<32x32xbf16>
    %cst_55 = arith.constant dense<0.000000e+00> : vector<16x32xf32>
    %128 = tpu.matmul %126, %127, %cst_55 {dimension_numbers = #tpu.dot_dimension_numbers<[1], [0], [0], [1], [0, 0, 1, 1], [], []>} : vector<16x32xbf16>, vector<32x32xbf16>, vector<16x32xf32> -> vector<16x32xf32>
    %c0_56 = arith.constant 0 : index
    %c0_57 = arith.constant 0 : index
    %129 = vector.load %arg10[%c0_56, %c0_57] : memref<1x32xf32, #tpu.memory_space<vmem>>, vector<1x32xf32>
    %130 = vector.broadcast %129 : vector<1x32xf32> to vector<16x32xf32>
    %131 = arith.addf %128, %130 : vector<16x32xf32>
    %cst_58 = arith.constant 0.000000e+00 : f32
    %132 = vector.broadcast %cst_58 : f32 to vector<16x32xf32>
    %133 = arith.maximumf %131, %132 : vector<16x32xf32>
    %134 = arith.truncf %133 : vector<16x32xf32> to vector<16x32xbf16>
    %c0_59 = arith.constant 0 : index
    %c0_60 = arith.constant 0 : index
    %135 = vector.load %arg11[%c0_59, %c0_60] : memref<32x32xbf16, #tpu.memory_space<vmem>>, vector<32x32xbf16>
    %cst_61 = arith.constant dense<0.000000e+00> : vector<16x32xf32>
    %136 = tpu.matmul %134, %135, %cst_61 {dimension_numbers = #tpu.dot_dimension_numbers<[1], [0], [0], [1], [0, 0, 1, 1], [], []>} : vector<16x32xbf16>, vector<32x32xbf16>, vector<16x32xf32> -> vector<16x32xf32>
    %c0_62 = arith.constant 0 : index
    %c0_63 = arith.constant 0 : index
    %137 = vector.load %arg12[%c0_62, %c0_63] : memref<1x32xf32, #tpu.memory_space<vmem>>, vector<1x32xf32>
    %138 = vector.broadcast %137 : vector<1x32xf32> to vector<16x32xf32>
    %139 = arith.addf %136, %138 : vector<16x32xf32>
    %140 = arith.addf %125, %139 : vector<16x32xf32>
    %c0_64 = arith.constant 0 : index
    %c0_65 = arith.constant 0 : index
    %141 = vector.load %arg15[%c0_64, %c0_65] : memref<1x32xf32, #tpu.memory_space<vmem>>, vector<1x32xf32>
    %c0_66 = arith.constant 0 : index
    %c0_67 = arith.constant 0 : index
    %142 = vector.load %arg16[%c0_66, %c0_67] : memref<1x32xf32, #tpu.memory_space<vmem>>, vector<1x32xf32>
    %cst_68 = arith.constant dense<0.000000e+00> : vector<16xf32>
    %143 = vector.multi_reduction <add>, %140, %cst_68 [1] : vector<16x32xf32> to vector<16xf32>
    %144 = vector.shape_cast %143 : vector<16xf32> to vector<16x1xf32>
    %cst_69 = arith.constant 3.200000e+01 : f32
    %145 = vector.broadcast %cst_69 : f32 to vector<16x1xf32>
    %146 = arith.divf %144, %145 : vector<16x1xf32>
    %147 = vector.broadcast %146 : vector<16x1xf32> to vector<16x32xf32>
    %148 = arith.subf %140, %147 : vector<16x32xf32>
    %149 = arith.mulf %148, %148 : vector<16x32xf32>
    %cst_70 = arith.constant dense<0.000000e+00> : vector<16xf32>
    %150 = vector.multi_reduction <add>, %149, %cst_70 [1] : vector<16x32xf32> to vector<16xf32>
    %151 = vector.shape_cast %150 : vector<16xf32> to vector<16x1xf32>
    %cst_71 = arith.constant 3.200000e+01 : f32
    %152 = vector.broadcast %cst_71 : f32 to vector<16x1xf32>
    %153 = arith.divf %151, %152 : vector<16x1xf32>
    %154 = vector.broadcast %146 : vector<16x1xf32> to vector<16x32xf32>
    %155 = arith.subf %140, %154 : vector<16x32xf32>
    %cst_72 = arith.constant 9.99999974E-6 : f32
    %156 = vector.broadcast %cst_72 : f32 to vector<16x1xf32>
    %157 = arith.addf %153, %156 : vector<16x1xf32>
    %158 = math.rsqrt %157 : vector<16x1xf32>
    %159 = vector.broadcast %158 : vector<16x1xf32> to vector<16x32xf32>
    %160 = arith.mulf %155, %159 : vector<16x32xf32>
    %161 = vector.broadcast %141 : vector<1x32xf32> to vector<16x32xf32>
    %162 = arith.mulf %160, %161 : vector<16x32xf32>
    %163 = vector.broadcast %142 : vector<1x32xf32> to vector<16x32xf32>
    %164 = arith.addf %162, %163 : vector<16x32xf32>
    %165 = vector.shape_cast %164 : vector<16x32xf32> to vector<2x8x32xf32>
    %c0_73 = arith.constant 0 : index
    %c0_74 = arith.constant 0 : index
    %c0_75 = arith.constant 0 : index
    %166 = vector.load %arg17[%c0_73, %c0_74, %c0_75] : memref<2x8x32xf32, #tpu.memory_space<vmem>>, vector<2x8x32xf32>
    tpu.vector_store %arg17[%c0_73, %c0_74, %c0_75], %165 {strides = array<i32>} : memref<2x8x32xf32, #tpu.memory_space<vmem>>, vector<2x8x32xf32>,
    return
  }
  func.func @transform_0(%arg0: i32) -> (i32, i32, i32) {
    %c0_i32 = arith.constant 0 : i32
    %c0_i32_0 = arith.constant 0 : i32
    %c0_i32_1 = arith.constant 0 : i32
    return %arg0, %c0_i32, %c0_i32_0 : i32, i32, i32
  }
  func.func @transform_1(%arg0: i32) -> (i32, i32, i32) {
    %c0_i32 = arith.constant 0 : i32
    %c0_i32_0 = arith.constant 0 : i32
    %c0_i32_1 = arith.constant 0 : i32
    return %arg0, %c0_i32, %c0_i32_0 : i32, i32, i32
  }
  func.func @transform_2(%arg0: i32) -> (i32, i32, i32) {
    %c0_i32 = arith.constant 0 : i32
    %c0_i32_0 = arith.constant 0 : i32
    %c0_i32_1 = arith.constant 0 : i32
    %c0_i32_2 = arith.constant 0 : i32
    return %c0_i32, %c0_i32_0, %c0_i32_1 : i32, i32, i32
  }
  func.func @transform_3(%arg0: i32) -> (i32, i32, i32) {
    %c0_i32 = arith.constant 0 : i32
    %c0_i32_0 = arith.constant 0 : i32
    %c0_i32_1 = arith.constant 0 : i32
    %c0_i32_2 = arith.constant 0 : i32
    return %c0_i32, %c0_i32_0, %c0_i32_1 : i32, i32, i32
  }
  func.func @transform_4(%arg0: i32) -> (i32, i32, i32) {
    %c0_i32 = arith.constant 0 : i32
    %c0_i32_0 = arith.constant 0 : i32
    %c0_i32_1 = arith.constant 0 : i32
    %c0_i32_2 = arith.constant 0 : i32
    return %c0_i32, %c0_i32_0, %c0_i32_1 : i32, i32, i32
  }
  func.func @transform_5(%arg0: i32) -> (i32, i32, i32) {
    %c0_i32 = arith.constant 0 : i32
    %c0_i32_0 = arith.constant 0 : i32
    %c0_i32_1 = arith.constant 0 : i32
    %c0_i32_2 = arith.constant 0 : i32
    return %c0_i32, %c0_i32_0, %c0_i32_1 : i32, i32, i32
  }
  func.func @transform_6(%arg0: i32) -> (i32, i32, i32) {
    %c0_i32 = arith.constant 0 : i32
    %c0_i32_0 = arith.constant 0 : i32
    %c0_i32_1 = arith.constant 0 : i32
    %c0_i32_2 = arith.constant 0 : i32
    return %c0_i32, %c0_i32_0, %c0_i32_1 : i32, i32, i32
  }
  func.func @transform_7(%arg0: i32) -> (i32, i32) {
    %c0_i32 = arith.constant 0 : i32
    %c0_i32_0 = arith.constant 0 : i32
    %c0_i32_1 = arith.constant 0 : i32
    return %c0_i32, %c0_i32_0 : i32, i32
  }
  func.func @transform_8(%arg0: i32) -> (i32, i32) {
    %c0_i32 = arith.constant 0 : i32
    %c0_i32_0 = arith.constant 0 : i32
    %c0_i32_1 = arith.constant 0 : i32
    return %c0_i32, %c0_i32_0 : i32, i32
  }
  func.func @transform_9(%arg0: i32) -> (i32, i32) {
    %c0_i32 = arith.constant 0 : i32
    %c0_i32_0 = arith.constant 0 : i32
    %c0_i32_1 = arith.constant 0 : i32
    return %c0_i32, %c0_i32_0 : i32, i32
  }
  func.func @transform_10(%arg0: i32) -> (i32, i32) {
    %c0_i32 = arith.constant 0 : i32
    %c0_i32_0 = arith.constant 0 : i32
    %c0_i32_1 = arith.constant 0 : i32
    return %c0_i32, %c0_i32_0 : i32, i32
  }
  func.func @transform_11(%arg0: i32) -> (i32, i32) {
    %c0_i32 = arith.constant 0 : i32
    %c0_i32_0 = arith.constant 0 : i32
    %c0_i32_1 = arith.constant 0 : i32
    return %c0_i32, %c0_i32_0 : i32, i32
  }
  func.func @transform_12(%arg0: i32) -> (i32, i32) {
    %c0_i32 = arith.constant 0 : i32
    %c0_i32_0 = arith.constant 0 : i32
    %c0_i32_1 = arith.constant 0 : i32
    return %c0_i32, %c0_i32_0 : i32, i32
  }
  func.func @transform_13(%arg0: i32) -> (i32, i32) {
    %c0_i32 = arith.constant 0 : i32
    %c0_i32_0 = arith.constant 0 : i32
    %c0_i32_1 = arith.constant 0 : i32
    return %c0_i32, %c0_i32_0 : i32, i32
  }
  func.func @transform_14(%arg0: i32) -> (i32, i32) {
    %c0_i32 = arith.constant 0 : i32
    %c0_i32_0 = arith.constant 0 : i32
    %c0_i32_1 = arith.constant 0 : i32
    return %c0_i32, %c0_i32_0 : i32, i32
  }
  func.func @transform_15(%arg0: i32) -> (i32, i32) {
    %c0_i32 = arith.constant 0 : i32
    %c0_i32_0 = arith.constant 0 : i32
    %c0_i32_1 = arith.constant 0 : i32
    return %c0_i32, %c0_i32_0 : i32, i32
  }
  func.func @transform_16(%arg0: i32) -> (i32, i32, i32) {
    %c0_i32 = arith.constant 0 : i32
    %c0_i32_0 = arith.constant 0 : i32
    %c0_i32_1 = arith.constant 0 : i32
    return %arg0, %c0_i32, %c0_i32_0 : i32, i32, i32
  }
  func.func @transform_17(%arg0: i32) -> (i32, i32, i32) {
    %c0_i32 = arith.constant 0 : i32
    %c0_i32_0 = arith.constant 0 : i32
    %c0_i32_1 = arith.constant 0 : i32
    return %arg0, %c0_i32, %c0_i32_0 : i32, i32, i32
  }
}

</mosaic_0001>

<llo_original>
// kernel: tpu_custom_call.1
$region0: #{tpu_custom_call.1}
  #allocation0 [shape = 'u32[]', space=smem, size = 0x4, offset = 0x4, fixed_abs, tag = 'smem constant byte address 0x4 - core index']
  #allocation1 [shape = 'u32[144,128]{1,0:T(1,128)}', space=vmem, size = 0x12000, scoped, tag = 'internal scratch']
  %s0 = inlined_call_operand.vmem [shape: f32[2,8,32], index: 0, kind: input, shape index: {}]
  %s1 = inlined_call_operand.vmem [shape: f32[2,8,32], index: 1, kind: input, shape index: {}]
  %s2 = inlined_call_operand.vmem [shape: bf16[4,32,8], index: 2, kind: input, shape index: {}]
  %s3 = inlined_call_operand.vmem [shape: f32[4,1,8], index: 3, kind: input, shape index: {}]
  %s4 = inlined_call_operand.vmem [shape: bf16[4,32,16], index: 4, kind: input, shape index: {}]
  %s5 = inlined_call_operand.vmem [shape: f32[4,1,16], index: 5, kind: input, shape index: {}]
  %s6 = inlined_call_operand.vmem [shape: bf16[4,8,32], index: 6, kind: input, shape index: {}]
  %s7 = inlined_call_operand.vmem [shape: f32[1,32], index: 7, kind: input, shape index: {}]
  %s8 = inlined_call_operand.vmem [shape: bf16[32,32], index: 8, kind: input, shape index: {}]
  %s9 = inlined_call_operand.vmem [shape: f32[1,32], index: 9, kind: input, shape index: {}]
  %s10 = inlined_call_operand.vmem [shape: bf16[32,32], index: 10, kind: input, shape index: {}]
  %s11 = inlined_call_operand.vmem [shape: f32[1,32], index: 11, kind: input, shape index: {}]
  %s12 = inlined_call_operand.vmem [shape: f32[1,32], index: 12, kind: input, shape index: {}]
  %s13 = inlined_call_operand.vmem [shape: f32[1,32], index: 13, kind: input, shape index: {}]
  %s14 = inlined_call_operand.vmem [shape: f32[1,32], index: 14, kind: input, shape index: {}]
  %s15 = inlined_call_operand.vmem [shape: f32[1,32], index: 15, kind: input, shape index: {}]
  %s16 = inlined_call_operand.hbm [shape: f32[2,8,32], index: 16, kind: output, shape index: {0}]
  %s17 = inlined_call_operand.hbm [shape: f32[2,8,8], index: 17, kind: output, shape index: {1}]
  %18 = xla_tuple %s16, %s17
  %s19 = sld [smem:[#allocation0]]
  $region82: #{tpu_custom_call.1} parent=0
    _
  %s21 = ssub.s32 1, %s19
  %s22 = scalar_select 0, %s21, %s19
  $region1: #{tpu_custom_call.1} parent=0
    #allocation2 [shape = 'u8[8192]{0}', space=vmem, size = 0x2000, scoped, tag = 'output window, operand 0, single buffered']
    #allocation3 [shape = 's32[1]{0}', space=sflag, size = 0x4, scoped, tag = 'scoped memory for tpu_custom_call.1']
    #allocation4 [shape = 'u8[8192]{0}', space=vmem, size = 0x2000, scoped, tag = 'output window, operand 1, single buffered']
    #allocation5 [shape = 's32[1]{0}', space=sflag, size = 0x4, scoped, tag = 'scoped memory for tpu_custom_call.1']
    %23 = vsyncpa [#allocation3], 0
    %24 = vsyncpa [#allocation5], 0
    // Predicated region
    $region2: #{tpu_custom_call.1} parent=1 // pred_check
      _
    $region3: #{tpu_custom_call.1} parent=1 // pred_check_branch
      %26 = sbr.rel (0) target = $region5
    $region4: #{tpu_custom_call.1} parent=1 // pred_region
      _
    $region5: #{tpu_custom_call.1} parent=1 // pred_fallthru
      _
    // Predicated region
    $region6: #{tpu_custom_call.1} parent=1 // pred_check
      _
    $region7: #{tpu_custom_call.1} parent=1 // pred_check_branch
      %28 = sbr.rel (0) target = $region9
    $region8: #{tpu_custom_call.1} parent=1 // pred_region
      _
    $region9: #{tpu_custom_call.1} parent=1 // pred_fallthru
      _
    // Predicated region
    $region10: #{tpu_custom_call.1} parent=1 // pred_check
      _
    $region11: #{tpu_custom_call.1} parent=1 // pred_check_branch
      %30 = sbr.rel (0) target = $region13
    $region12: #{tpu_custom_call.1} parent=1 // pred_region
      _
    $region13: #{tpu_custom_call.1} parent=1 // pred_fallthru
      _
    // Predicated region
    $region14: #{tpu_custom_call.1} parent=1 // pred_check
      _
    $region15: #{tpu_custom_call.1} parent=1 // pred_check_branch
      %32 = sbr.rel (0) target = $region17
    $region16: #{tpu_custom_call.1} parent=1 // pred_region
      _
    $region17: #{tpu_custom_call.1} parent=1 // pred_fallthru
      _
    // Predicated region
    $region18: #{tpu_custom_call.1} parent=1 // pred_check
      _
    $region19: #{tpu_custom_call.1} parent=1 // pred_check_branch
      %34 = sbr.rel (0) target = $region21
    $region20: #{tpu_custom_call.1} parent=1 // pred_region
      _
    $region21: #{tpu_custom_call.1} parent=1 // pred_fallthru
      _
    // Predicated region
    $region22: #{tpu_custom_call.1} parent=1 // pred_check
      _
    $region23: #{tpu_custom_call.1} parent=1 // pred_check_branch
      %36 = sbr.rel (0) target = $region25
    $region24: #{tpu_custom_call.1} parent=1 // pred_region
      _
    $region25: #{tpu_custom_call.1} parent=1 // pred_fallthru
      _
    // Predicated region
    $region26: #{tpu_custom_call.1} parent=1 // pred_check
      _
    $region27: #{tpu_custom_call.1} parent=1 // pred_check_branch
      %38 = sbr.rel (0) target = $region29
    $region28: #{tpu_custom_call.1} parent=1 // pred_region
      _
    $region29: #{tpu_custom_call.1} parent=1 // pred_fallthru
      _
    // Predicated region
    $region30: #{tpu_custom_call.1} parent=1 // pred_check
      _
    $region31: #{tpu_custom_call.1} parent=1 // pred_check_branch
      %40 = sbr.rel (0) target = $region33
    $region32: #{tpu_custom_call.1} parent=1 // pred_region
      _
    $region33: #{tpu_custom_call.1} parent=1 // pred_fallthru
      _
    // Predicated region
    $region34: #{tpu_custom_call.1} parent=1 // pred_check
      _
    $region35: #{tpu_custom_call.1} parent=1 // pred_check_branch
      %42 = sbr.rel (0) target = $region37
    $region36: #{tpu_custom_call.1} parent=1 // pred_region
      _
    $region37: #{tpu_custom_call.1} parent=1 // pred_fallthru
      _
    // Predicated region
    $region38: #{tpu_custom_call.1} parent=1 // pred_check
      _
    $region39: #{tpu_custom_call.1} parent=1 // pred_check_branch
      %44 = sbr.rel (0) target = $region41
    $region40: #{tpu_custom_call.1} parent=1 // pred_region
      _
    $region41: #{tpu_custom_call.1} parent=1 // pred_fallthru
      _
    // Predicated region
    $region42: #{tpu_custom_call.1} parent=1 // pred_check
      _
    $region43: #{tpu_custom_call.1} parent=1 // pred_check_branch
      %46 = sbr.rel (0) target = $region45
    $region44: #{tpu_custom_call.1} parent=1 // pred_region
      _
    $region45: #{tpu_custom_call.1} parent=1 // pred_fallthru
      _
    // Predicated region
    $region46: #{tpu_custom_call.1} parent=1 // pred_check
      _
    $region47: #{tpu_custom_call.1} parent=1 // pred_check_branch
      %48 = sbr.rel (0) target = $region49
    $region48: #{tpu_custom_call.1} parent=1 // pred_region
      _
    $region49: #{tpu_custom_call.1} parent=1 // pred_fallthru
      _
    // Predicated region
    $region50: #{tpu_custom_call.1} parent=1 // pred_check
      _
    $region51: #{tpu_custom_call.1} parent=1 // pred_check_branch
      %50 = sbr.rel (0) target = $region53
    $region52: #{tpu_custom_call.1} parent=1 // pred_region
      _
    $region53: #{tpu_custom_call.1} parent=1 // pred_fallthru
      _
    // Predicated region
    $region54: #{tpu_custom_call.1} parent=1 // pred_check
      _
    $region55: #{tpu_custom_call.1} parent=1 // pred_check_branch
      %52 = sbr.rel (0) target = $region57
    $region56: #{tpu_custom_call.1} parent=1 // pred_region
      _
    $region57: #{tpu_custom_call.1} parent=1 // pred_fallthru
      _
    // Predicated region
    $region58: #{tpu_custom_call.1} parent=1 // pred_check
      _
    $region59: #{tpu_custom_call.1} parent=1 // pred_check_branch
      %54 = sbr.rel (0) target = $region61
    $region60: #{tpu_custom_call.1} parent=1 // pred_region
      _
    $region61: #{tpu_custom_call.1} parent=1 // pred_fallthru
      _
    // Predicated region
    $region62: #{tpu_custom_call.1} parent=1 // pred_check
      _
    $region63: #{tpu_custom_call.1} parent=1 // pred_check_branch
      %56 = sbr.rel (0) target = $region65
    $region64: #{tpu_custom_call.1} parent=1 // pred_region
      _
    $region65: #{tpu_custom_call.1} parent=1 // pred_fallthru
      _
    %v58 = vld [vmem:[%s0] sm:$0xff]
    %v59 = vld [vmem:[%s0 + $0x8] sm:$0xff]
    %v60 = vld [vmem:[%s1] sm:$0xff]
    %v61 = vld [vmem:[%s1 + $0x8] sm:$0xff]
    %v62 = vpack.c.bf16 %v58, %v58
    %v63 = vpack.c.bf16 %v59, %v59
    %v64 = vpack.c.bf16 %v60, %v60
    %v65 = vpack.c.bf16 %v61, %v61
    %v66 = vld [vmem:[%s2] sm:$0xf]
    %v67 = vld [vmem:[%s2 + $0x4] sm:$0xf]
    %v68 = vld [vmem:[%s2 + $0x8] sm:$0xf]
    %v69 = vld [vmem:[%s2 + $0xc] sm:$0xf]
    %v70 = vld [vmem:[%s2 + $0x10] sm:$0xf]
    %v71 = vld [vmem:[%s2 + $0x14] sm:$0xf]
    %v72 = vld [vmem:[%s2 + $0x18] sm:$0xf]
    %v73 = vld [vmem:[%s2 + $0x1c] sm:$0xf]
    %v74 = vld [vmem:[%s2 + $0x20] sm:$0xf]
    %v75 = vld [vmem:[%s2 + $0x24] sm:$0xf]
    %v76 = vld [vmem:[%s2 + $0x28] sm:$0xf]
    %v77 = vld [vmem:[%s2 + $0x2c] sm:$0xf]
    %v78 = vld [vmem:[%s2 + $0x30] sm:$0xf]
    %v79 = vld [vmem:[%s2 + $0x34] sm:$0xf]
    %v80 = vld [vmem:[%s2 + $0x38] sm:$0xf]
    %v81 = vld [vmem:[%s2 + $0x3c] sm:$0xf]
    %v82 = vld [vmem:[%s4] sm:$0xf]
    %v83 = vld [vmem:[%s4 + $0x4] sm:$0xf]
    %v84 = vld [vmem:[%s4 + $0x8] sm:$0xf]
    %v85 = vld [vmem:[%s4 + $0xc] sm:$0xf]
    %v86 = vld [vmem:[%s4 + $0x10] sm:$0xf]
    %v87 = vld [vmem:[%s4 + $0x14] sm:$0xf]
    %v88 = vld [vmem:[%s4 + $0x18] sm:$0xf]
    %v89 = vld [vmem:[%s4 + $0x1c] sm:$0xf]
    %v90 = vld [vmem:[%s4 + $0x20] sm:$0xf]
    %v91 = vld [vmem:[%s4 + $0x24] sm:$0xf]
    %v92 = vld [vmem:[%s4 + $0x28] sm:$0xf]
    %v93 = vld [vmem:[%s4 + $0x2c] sm:$0xf]
    %v94 = vld [vmem:[%s4 + $0x30] sm:$0xf]
    %v95 = vld [vmem:[%s4 + $0x34] sm:$0xf]
    %v96 = vld [vmem:[%s4 + $0x38] sm:$0xf]
    %v97 = vld [vmem:[%s4 + $0x3c] sm:$0xf]
    %v98 = vld [vmem:[%s3] sm:$0x1]
    %v99 = vld [vmem:[%s3 + $0x1] sm:$0x1]
    %v100 = vld [vmem:[%s3 + $0x2] sm:$0x1]
    %v101 = vld [vmem:[%s3 + $0x3] sm:$0x1]
    %v102 = vld [vmem:[%s5] sm:$0x1]
    %v103 = vld [vmem:[%s5 + $0x1] sm:$0x1]
    %v104 = vld [vmem:[%s5 + $0x2] sm:$0x1]
    %v105 = vld [vmem:[%s5 + $0x3] sm:$0x1]
    %v110 = vlaneseq
    %v111 = vshrl.u32 %v110, 7
    %v112 = vsub.s32 0, %v111
    %v113 = vrot.slane %v98, %v112
    %v114 = vlaneseq
    %v115 = vshrl.u32 %v114, 7
    %v116 = vsub.s32 0, %v115
    %v117 = vrot.slane %v99, %v116
    %v118 = vlaneseq
    %v119 = vshrl.u32 %v118, 7
    %v120 = vsub.s32 0, %v119
    %v121 = vrot.slane %v100, %v120
    %v122 = vlaneseq
    %v123 = vshrl.u32 %v122, 7
    %v124 = vsub.s32 0, %v123
    %v125 = vrot.slane %v101, %v124
    %v134 = vunpack.c.l.b16 %v66
    %v135 = vunpack.c.l.b16 %v67
    %v136 = vunpack.c.l.b16 %v68
    %v137 = vunpack.c.l.b16 %v69
    %v138 = vpack.c.b16 %v135, %v134
    %v139 = vpack.c.b16 %v137, %v136
    %vm142 = vcmask 261120
    %v144 = vsel %vm142, %v62, 0
    %146 = vmatprep.subr.bf16.mxu0 0
    %147 = vmatpush1.bf16.msra.mxu0 %v138
    %148 = vmatprep.subr.bf16.mxu0 0
    %149 = vmatpush1.bf16.msra.mxu0 %v139
    %150 = vmatprep.subr.bf16.mxu0 0
    %151 = vmatpush1.bf16.msra.mxu0 0
    %152 = vmatprep.subr.bf16.mxu0 0
    %153 = vmatpush1.bf16.msra.mxu0 0
    %154 = vmatprep.subr.bf16.mxu0 0
    %155 = vmatpush1.bf16.msra.mxu0 0
    %156 = vmatprep.subr.bf16.mxu0 0
    %157 = vmatpush1.bf16.msra.mxu0 0
    %158 = vmatprep.subr.bf16.mxu0 0
    %159 = vmatpush1.bf16.msra.mxu0 0
    %160 = vmatprep.subr.bf16.mxu0 0
    %161 = vmatpush1.bf16.msra.mxu0 0
    %162 = vmatprep.subr.bf16.mxu0 0
    %163 = vmatpush1.bf16.msra.mxu0 0
    %164 = vmatprep.subr.bf16.mxu0 0
    %165 = vmatpush1.bf16.msra.mxu0 0
    %166 = vmatprep.subr.bf16.mxu0 0
    %167 = vmatpush1.bf16.msra.mxu0 0
    %168 = vmatprep.subr.bf16.mxu0 0
    %169 = vmatpush1.bf16.msra.mxu0 0
    %170 = vmatprep.subr.bf16.mxu0 0
    %171 = vmatpush1.bf16.msra.mxu0 0
    %172 = vmatprep.subr.bf16.mxu0 0
    %173 = vmatpush1.bf16.msra.mxu0 0
    %174 = vmatprep.subr.bf16.mxu0 0
    %175 = vmatpush1.bf16.msra.mxu0 0
    %176 = vmatprep.subr.bf16.mxu0 0
    %177 = vmatpush1.bf16.msra.mxu0 0
    %178 = vmatprep.mubr.bf16.mxu0 0
    %179 = vmatmul.mubr.bf16.gmra.mrb[0].mxu0 %v144
    %v180 = vpop.f32.mrb[0].mxu0
    %v181 = vadd.f32 %v113, %v180
    %v182 = vpop.f32.mrb[0].mxu0
    %v183 = vpop.f32.mrb[0].mxu0
    %v184 = vpop.f32.mrb[0].mxu0
    %185 = vdwg.mxu0
    %v190 = vunpack.c.l.b16 %v70
    %v191 = vunpack.c.l.b16 %v71
    %v192 = vunpack.c.l.b16 %v72
    %v193 = vunpack.c.l.b16 %v73
    %v194 = vpack.c.b16 %v191, %v190
    %v195 = vpack.c.b16 %v193, %v192
    %198 = vmatprep.subr.bf16.mxu0 0
    %199 = vmatpush1.bf16.msra.mxu0 %v194
    %200 = vmatprep.subr.bf16.mxu0 0
    %201 = vmatpush1.bf16.msra.mxu0 %v195
    %202 = vmatprep.subr.bf16.mxu0 0
    %203 = vmatpush1.bf16.msra.mxu0 0
    %204 = vmatprep.subr.bf16.mxu0 0
    %205 = vmatpush1.bf16.msra.mxu0 0
    %206 = vmatprep.subr.bf16.mxu0 0
    %207 = vmatpush1.bf16.msra.mxu0 0
    %208 = vmatprep.subr.bf16.mxu0 0
    %209 = vmatpush1.bf16.msra.mxu0 0
    %210 = vmatprep.subr.bf16.mxu0 0
    %211 = vmatpush1.bf16.msra.mxu0 0
    %212 = vmatprep.subr.bf16.mxu0 0
    %213 = vmatpush1.bf16.msra.mxu0 0
    %214 = vmatprep.subr.bf16.mxu0 0
    %215 = vmatpush1.bf16.msra.mxu0 0
    %216 = vmatprep.subr.bf16.mxu0 0
    %217 = vmatpush1.bf16.msra.mxu0 0
    %218 = vmatprep.subr.bf16.mxu0 0
    %219 = vmatpush1.bf16.msra.mxu0 0
    %220 = vmatprep.subr.bf16.mxu0 0
    %221 = vmatpush1.bf16.msra.mxu0 0
    %222 = vmatprep.subr.bf16.mxu0 0
    %223 = vmatpush1.bf16.msra.mxu0 0
    %224 = vmatprep.subr.bf16.mxu0 0
    %225 = vmatpush1.bf16.msra.mxu0 0
    %226 = vmatprep.subr.bf16.mxu0 0
    %227 = vmatpush1.bf16.msra.mxu0 0
    %228 = vmatprep.subr.bf16.mxu0 0
    %229 = vmatpush1.bf16.msra.mxu0 0
    %230 = vmatprep.mubr.bf16.mxu0 0
    %231 = vmatmul.mubr.bf16.gmra.mrb[0].mxu0 %v144
    %v232 = vpop.f32.mrb[0].mxu0
    %v233 = vadd.f32 %v117, %v232
    %v234 = vpop.f32.mrb[0].mxu0
    %v235 = vpop.f32.mrb[0].mxu0
    %v236 = vpop.f32.mrb[0].mxu0
    %237 = vdwg.mxu0
    %v242 = vunpack.c.l.b16 %v74
    %v243 = vunpack.c.l.b16 %v75
    %v244 = vunpack.c.l.b16 %v76
    %v245 = vunpack.c.l.b16 %v77
    %v246 = vpack.c.b16 %v243, %v242
    %v247 = vpack.c.b16 %v245, %v244
    %250 = vmatprep.subr.bf16.mxu0 0
    %251 = vmatpush1.bf16.msra.mxu0 %v246
    %252 = vmatprep.subr.bf16.mxu0 0
    %253 = vmatpush1.bf16.msra.mxu0 %v247
    %254 = vmatprep.subr.bf16.mxu0 0
    %255 = vmatpush1.bf16.msra.mxu0 0
    %256 = vmatprep.subr.bf16.mxu0 0
    %257 = vmatpush1.bf16.msra.mxu0 0
    %258 = vmatprep.subr.bf16.mxu0 0
    %259 = vmatpush1.bf16.msra.mxu0 0
    %260 = vmatprep.subr.bf16.mxu0 0
    %261 = vmatpush1.bf16.msra.mxu0 0
    %262 = vmatprep.subr.bf16.mxu0 0
    %263 = vmatpush1.bf16.msra.mxu0 0
    %264 = vmatprep.subr.bf16.mxu0 0
    %265 = vmatpush1.bf16.msra.mxu0 0
    %266 = vmatprep.subr.bf16.mxu0 0
    %267 = vmatpush1.bf16.msra.mxu0 0
    %268 = vmatprep.subr.bf16.mxu0 0
    %269 = vmatpush1.bf16.msra.mxu0 0
    %270 = vmatprep.subr.bf16.mxu0 0
    %271 = vmatpush1.bf16.msra.mxu0 0
    %272 = vmatprep.subr.bf16.mxu0 0
    %273 = vmatpush1.bf16.msra.mxu0 0
    %274 = vmatprep.subr.bf16.mxu0 0
    %275 = vmatpush1.bf16.msra.mxu0 0
    %276 = vmatprep.subr.bf16.mxu0 0
    %277 = vmatpush1.bf16.msra.mxu0 0
    %278 = vmatprep.subr.bf16.mxu0 0
    %279 = vmatpush1.bf16.msra.mxu0 0
    %280 = vmatprep.subr.bf16.mxu0 0
    %281 = vmatpush1.bf16.msra.mxu0 0
    %282 = vmatprep.mubr.bf16.mxu0 0
    %283 = vmatmul.mubr.bf16.gmra.mrb[0].mxu0 %v144
    %v284 = vpop.f32.mrb[0].mxu0
    %v285 = vadd.f32 %v121, %v284
    %v286 = vpop.f32.mrb[0].mxu0
    %v287 = vpop.f32.mrb[0].mxu0
    %v288 = vpop.f32.mrb[0].mxu0
    %289 = vdwg.mxu0
    %v294 = vunpack.c.l.b16 %v78
    %v295 = vunpack.c.l.b16 %v79
    %v296 = vunpack.c.l.b16 %v80
    %v297 = vunpack.c.l.b16 %v81
    %v298 = vpack.c.b16 %v295, %v294
    %v299 = vpack.c.b16 %v297, %v296
    %302 = vmatprep.subr.bf16.mxu0 0
    %303 = vmatpush1.bf16.msra.mxu0 %v298
    %304 = vmatprep.subr.bf16.mxu0 0
    %305 = vmatpush1.bf16.msra.mxu0 %v299
    %306 = vmatprep.subr.bf16.mxu0 0
    %307 = vmatpush1.bf16.msra.mxu0 0
    %308 = vmatprep.subr.bf16.mxu0 0
    %309 = vmatpush1.bf16.msra.mxu0 0
    %310 = vmatprep.subr.bf16.mxu0 0
    %311 = vmatpush1.bf16.msra.mxu0 0
    %312 = vmatprep.subr.bf16.mxu0 0
    %313 = vmatpush1.bf16.msra.mxu0 0
    %314 = vmatprep.subr.bf16.mxu0 0
    %315 = vmatpush1.bf16.msra.mxu0 0
    %316 = vmatprep.subr.bf16.mxu0 0
    %317 = vmatpush1.bf16.msra.mxu0 0
    %318 = vmatprep.subr.bf16.mxu0 0
    %319 = vmatpush1.bf16.msra.mxu0 0
    %320 = vmatprep.subr.bf16.mxu0 0
    %321 = vmatpush1.bf16.msra.mxu0 0
    %322 = vmatprep.subr.bf16.mxu0 0
    %323 = vmatpush1.bf16.msra.mxu0 0
    %324 = vmatprep.subr.bf16.mxu0 0
    %325 = vmatpush1.bf16.msra.mxu0 0
    %326 = vmatprep.subr.bf16.mxu0 0
    %327 = vmatpush1.bf16.msra.mxu0 0
    %328 = vmatprep.subr.bf16.mxu0 0
    %329 = vmatpush1.bf16.msra.mxu0 0
    %330 = vmatprep.subr.bf16.mxu0 0
    %331 = vmatpush1.bf16.msra.mxu0 0
    %332 = vmatprep.subr.bf16.mxu0 0
    %333 = vmatpush1.bf16.msra.mxu0 0
    %334 = vmatprep.mubr.bf16.mxu0 0
    %335 = vmatmul.mubr.bf16.gmra.mrb[0].mxu0 %v144
    %v336 = vpop.f32.mrb[0].mxu0
    %v337 = vadd.f32 %v125, %v336
    %v338 = vpop.f32.mrb[0].mxu0
    %v339 = vpop.f32.mrb[0].mxu0
    %v340 = vpop.f32.mrb[0].mxu0
    %341 = vdwg.mxu0
    %v343 = vsel %vm142, %v63, 0
    %345 = vmatprep.subr.bf16.mxu0 0
    %346 = vmatpush1.bf16.msra.mxu0 %v138
    %347 = vmatprep.subr.bf16.mxu0 0
    %348 = vmatpush1.bf16.msra.mxu0 %v139
    %349 = vmatprep.subr.bf16.mxu0 0
    %350 = vmatpush1.bf16.msra.mxu0 0
    %351 = vmatprep.subr.bf16.mxu0 0
    %352 = vmatpush1.bf16.msra.mxu0 0
    %353 = vmatprep.subr.bf16.mxu0 0
    %354 = vmatpush1.bf16.msra.mxu0 0
    %355 = vmatprep.subr.bf16.mxu0 0
    %356 = vmatpush1.bf16.msra.mxu0 0
    %357 = vmatprep.subr.bf16.mxu0 0
    %358 = vmatpush1.bf16.msra.mxu0 0
    %359 = vmatprep.subr.bf16.mxu0 0
    %360 = vmatpush1.bf16.msra.mxu0 0
    %361 = vmatprep.subr.bf16.mxu0 0
    %362 = vmatpush1.bf16.msra.mxu0 0
    %363 = vmatprep.subr.bf16.mxu0 0
    %364 = vmatpush1.bf16.msra.mxu0 0
    %365 = vmatprep.subr.bf16.mxu0 0
    %366 = vmatpush1.bf16.msra.mxu0 0
    %367 = vmatprep.subr.bf16.mxu0 0
    %368 = vmatpush1.bf16.msra.mxu0 0
    %369 = vmatprep.subr.bf16.mxu0 0
    %370 = vmatpush1.bf16.msra.mxu0 0
    %371 = vmatprep.subr.bf16.mxu0 0
    %372 = vmatpush1.bf16.msra.mxu0 0
    %373 = vmatprep.subr.bf16.mxu0 0
    %374 = vmatpush1.bf16.msra.mxu0 0
    %375 = vmatprep.subr.bf16.mxu0 0
    %376 = vmatpush1.bf16.msra.mxu0 0
    %377 = vmatprep.mubr.bf16.mxu0 0
    %378 = vmatmul.mubr.bf16.gmra.mrb[0].mxu0 %v343
    %v379 = vpop.f32.mrb[0].mxu0
    %v380 = vadd.f32 %v113, %v379
    %v381 = vpop.f32.mrb[0].mxu0
    %v382 = vpop.f32.mrb[0].mxu0
    %v383 = vpop.f32.mrb[0].mxu0
    %384 = vdwg.mxu0
    %385 = vmatprep.subr.bf16.mxu0 0
    %386 = vmatpush1.bf16.msra.mxu0 %v194
    %387 = vmatprep.subr.bf16.mxu0 0
    %388 = vmatpush1.bf16.msra.mxu0 %v195
    %389 = vmatprep.subr.bf16.mxu0 0
    %390 = vmatpush1.bf16.msra.mxu0 0
    %391 = vmatprep.subr.bf16.mxu0 0
    %392 = vmatpush1.bf16.msra.mxu0 0
    %393 = vmatprep.subr.bf16.mxu0 0
    %394 = vmatpush1.bf16.msra.mxu0 0
    %395 = vmatprep.subr.bf16.mxu0 0
    %396 = vmatpush1.bf16.msra.mxu0 0
    %397 = vmatprep.subr.bf16.mxu0 0
    %398 = vmatpush1.bf16.msra.mxu0 0
    %399 = vmatprep.subr.bf16.mxu0 0
    %400 = vmatpush1.bf16.msra.mxu0 0
    %401 = vmatprep.subr.bf16.mxu0 0
    %402 = vmatpush1.bf16.msra.mxu0 0
    %403 = vmatprep.subr.bf16.mxu0 0
    %404 = vmatpush1.bf16.msra.mxu0 0
    %405 = vmatprep.subr.bf16.mxu0 0
    %406 = vmatpush1.bf16.msra.mxu0 0
    %407 = vmatprep.subr.bf16.mxu0 0
    %408 = vmatpush1.bf16.msra.mxu0 0
    %409 = vmatprep.subr.bf16.mxu0 0
    %410 = vmatpush1.bf16.msra.mxu0 0
    %411 = vmatprep.subr.bf16.mxu0 0
    %412 = vmatpush1.bf16.msra.mxu0 0
    %413 = vmatprep.subr.bf16.mxu0 0
    %414 = vmatpush1.bf16.msra.mxu0 0
    %415 = vmatprep.subr.bf16.mxu0 0
    %416 = vmatpush1.bf16.msra.mxu0 0
    %417 = vmatprep.mubr.bf16.mxu0 0
    %418 = vmatmul.mubr.bf16.gmra.mrb[0].mxu0 %v343
    %v419 = vpop.f32.mrb[0].mxu0
    %v420 = vadd.f32 %v117, %v419
    %v421 = vpop.f32.mrb[0].mxu0
    %v422 = vpop.f32.mrb[0].mxu0
    %v423 = vpop.f32.mrb[0].mxu0
    %424 = vdwg.mxu0
    %425 = vmatprep.subr.bf16.mxu0 0
    %426 = vmatpush1.bf16.msra.mxu0 %v246
    %427 = vmatprep.subr.bf16.mxu0 0
    %428 = vmatpush1.bf16.msra.mxu0 %v247
    %429 = vmatprep.subr.bf16.mxu0 0
    %430 = vmatpush1.bf16.msra.mxu0 0
    %431 = vmatprep.subr.bf16.mxu0 0
    %432 = vmatpush1.bf16.msra.mxu0 0
    %433 = vmatprep.subr.bf16.mxu0 0
    %434 = vmatpush1.bf16.msra.mxu0 0
    %435 = vmatprep.subr.bf16.mxu0 0
    %436 = vmatpush1.bf16.msra.mxu0 0
    %437 = vmatprep.subr.bf16.mxu0 0
    %438 = vmatpush1.bf16.msra.mxu0 0
    %439 = vmatprep.subr.bf16.mxu0 0
    %440 = vmatpush1.bf16.msra.mxu0 0
    %441 = vmatprep.subr.bf16.mxu0 0
    %442 = vmatpush1.bf16.msra.mxu0 0
    %443 = vmatprep.subr.bf16.mxu0 0
    %444 = vmatpush1.bf16.msra.mxu0 0
    %445 = vmatprep.subr.bf16.mxu0 0
    %446 = vmatpush1.bf16.msra.mxu0 0
    %447 = vmatprep.subr.bf16.mxu0 0
    %448 = vmatpush1.bf16.msra.mxu0 0
    %449 = vmatprep.subr.bf16.mxu0 0
    %450 = vmatpush1.bf16.msra.mxu0 0
    %451 = vmatprep.subr.bf16.mxu0 0
    %452 = vmatpush1.bf16.msra.mxu0 0
    %453 = vmatprep.subr.bf16.mxu0 0
    %454 = vmatpush1.bf16.msra.mxu0 0
    %455 = vmatprep.subr.bf16.mxu0 0
    %456 = vmatpush1.bf16.msra.mxu0 0
    %457 = vmatprep.mubr.bf16.mxu0 0
    %458 = vmatmul.mubr.bf16.gmra.mrb[0].mxu0 %v343
    %v459 = vpop.f32.mrb[0].mxu0
    %v460 = vadd.f32 %v121, %v459
    %v461 = vpop.f32.mrb[0].mxu0
    %v462 = vpop.f32.mrb[0].mxu0
    %v463 = vpop.f32.mrb[0].mxu0
    %464 = vdwg.mxu0
    %465 = vmatprep.subr.bf16.mxu0 0
    %466 = vmatpush1.bf16.msra.mxu0 %v298
    %467 = vmatprep.subr.bf16.mxu0 0
    %468 = vmatpush1.bf16.msra.mxu0 %v299
    %469 = vmatprep.subr.bf16.mxu0 0
    %470 = vmatpush1.bf16.msra.mxu0 0
    %471 = vmatprep.subr.bf16.mxu0 0
    %472 = vmatpush1.bf16.msra.mxu0 0
    %473 = vmatprep.subr.bf16.mxu0 0
    %474 = vmatpush1.bf16.msra.mxu0 0
    %475 = vmatprep.subr.bf16.mxu0 0
    %476 = vmatpush1.bf16.msra.mxu0 0
    %477 = vmatprep.subr.bf16.mxu0 0
    %478 = vmatpush1.bf16.msra.mxu0 0
    %479 = vmatprep.subr.bf16.mxu0 0
    %480 = vmatpush1.bf16.msra.mxu0 0
    %481 = vmatprep.subr.bf16.mxu0 0
    %482 = vmatpush1.bf16.msra.mxu0 0
    %483 = vmatprep.subr.bf16.mxu0 0
    %484 = vmatpush1.bf16.msra.mxu0 0
    %485 = vmatprep.subr.bf16.mxu0 0
    %486 = vmatpush1.bf16.msra.mxu0 0
    %487 = vmatprep.subr.bf16.mxu0 0
    %488 = vmatpush1.bf16.msra.mxu0 0
    %489 = vmatprep.subr.bf16.mxu0 0
    %490 = vmatpush1.bf16.msra.mxu0 0
    %491 = vmatprep.subr.bf16.mxu0 0
    %492 = vmatpush1.bf16.msra.mxu0 0
    %493 = vmatprep.subr.bf16.mxu0 0
    %494 = vmatpush1.bf16.msra.mxu0 0
    %495 = vmatprep.subr.bf16.mxu0 0
    %496 = vmatpush1.bf16.msra.mxu0 0
    %497 = vmatprep.mubr.bf16.mxu0 0
    %498 = vmatmul.mubr.bf16.gmra.mrb[0].mxu0 %v343
    %v499 = vpop.f32.mrb[0].mxu0
    %v500 = vadd.f32 %v125, %v499
    %v501 = vpop.f32.mrb[0].mxu0
    %v502 = vpop.f32.mrb[0].mxu0
    %v503 = vpop.f32.mrb[0].mxu0
    %504 = vdwg.mxu0
    %v509 = vlaneseq
    %v510 = vshrl.u32 %v509, 7
    %v511 = vsub.s32 0, %v510
    %v512 = vrot.slane %v102, %v511
    %v513 = vlaneseq
    %v514 = vshrl.u32 %v513, 7
    %v515 = vsub.s32 0, %v514
    %v516 = vrot.slane %v103, %v515
    %v517 = vlaneseq
    %v518 = vshrl.u32 %v517, 7
    %v519 = vsub.s32 0, %v518
    %v520 = vrot.slane %v104, %v519
    %v521 = vlaneseq
    %v522 = vshrl.u32 %v521, 7
    %v523 = vsub.s32 0, %v522
    %v524 = vrot.slane %v105, %v523
    %v533 = vunpack.c.l.b16 %v82
    %v534 = vunpack.c.l.b16 %v83
    %v535 = vunpack.c.l.b16 %v84
    %v536 = vunpack.c.l.b16 %v85
    %v537 = vpack.c.b16 %v534, %v533
    %v538 = vpack.c.b16 %v536, %v535
    %v542 = vsel %vm142, %v64, 0
    %544 = vmatprep.subr.bf16.mxu0 0
    %545 = vmatpush1.bf16.msra.mxu0 %v537
    %546 = vmatprep.subr.bf16.mxu0 0
    %547 = vmatpush1.bf16.msra.mxu0 %v538
    %548 = vmatprep.subr.bf16.mxu0 0
    %549 = vmatpush1.bf16.msra.mxu0 0
    %550 = vmatprep.subr.bf16.mxu0 0
    %551 = vmatpush1.bf16.msra.mxu0 0
    %552 = vmatprep.subr.bf16.mxu0 0
    %553 = vmatpush1.bf16.msra.mxu0 0
    %554 = vmatprep.subr.bf16.mxu0 0
    %555 = vmatpush1.bf16.msra.mxu0 0
    %556 = vmatprep.subr.bf16.mxu0 0
    %557 = vmatpush1.bf16.msra.mxu0 0
    %558 = vmatprep.subr.bf16.mxu0 0
    %559 = vmatpush1.bf16.msra.mxu0 0
    %560 = vmatprep.subr.bf16.mxu0 0
    %561 = vmatpush1.bf16.msra.mxu0 0
    %562 = vmatprep.subr.bf16.mxu0 0
    %563 = vmatpush1.bf16.msra.mxu0 0
    %564 = vmatprep.subr.bf16.mxu0 0
    %565 = vmatpush1.bf16.msra.mxu0 0
    %566 = vmatprep.subr.bf16.mxu0 0
    %567 = vmatpush1.bf16.msra.mxu0 0
    %568 = vmatprep.subr.bf16.mxu0 0
    %569 = vmatpush1.bf16.msra.mxu0 0
    %570 = vmatprep.subr.bf16.mxu0 0
    %571 = vmatpush1.bf16.msra.mxu0 0
    %572 = vmatprep.subr.bf16.mxu0 0
    %573 = vmatpush1.bf16.msra.mxu0 0
    %574 = vmatprep.subr.bf16.mxu0 0
    %575 = vmatpush1.bf16.msra.mxu0 0
    %576 = vmatprep.mubr.bf16.mxu0 0
    %577 = vmatmul.mubr.bf16.gmra.mrb[0].mxu0 %v542
    %v578 = vpop.f32.mrb[0].mxu0
    %v579 = vadd.f32 %v512, %v578
    %v580 = vpop.f32.mrb[0].mxu0
    %v581 = vpop.f32.mrb[0].mxu0
    %v582 = vpop.f32.mrb[0].mxu0
    %583 = vdwg.mxu0
    %v588 = vunpack.c.l.b16 %v86
    %v589 = vunpack.c.l.b16 %v87
    %v590 = vunpack.c.l.b16 %v88
    %v591 = vunpack.c.l.b16 %v89
    %v592 = vpack.c.b16 %v589, %v588
    %v593 = vpack.c.b16 %v591, %v590
    %596 = vmatprep.subr.bf16.mxu0 0
    %597 = vmatpush1.bf16.msra.mxu0 %v592
    %598 = vmatprep.subr.bf16.mxu0 0
    %599 = vmatpush1.bf16.msra.mxu0 %v593
    %600 = vmatprep.subr.bf16.mxu0 0
    %601 = vmatpush1.bf16.msra.mxu0 0
    %602 = vmatprep.subr.bf16.mxu0 0
    %603 = vmatpush1.bf16.msra.mxu0 0
    %604 = vmatprep.subr.bf16.mxu0 0
    %605 = vmatpush1.bf16.msra.mxu0 0
    %606 = vmatprep.subr.bf16.mxu0 0
    %607 = vmatpush1.bf16.msra.mxu0 0
    %608 = vmatprep.subr.bf16.mxu0 0
    %609 = vmatpush1.bf16.msra.mxu0 0
    %610 = vmatprep.subr.bf16.mxu0 0
    %611 = vmatpush1.bf16.msra.mxu0 0
    %612 = vmatprep.subr.bf16.mxu0 0
    %613 = vmatpush1.bf16.msra.mxu0 0
    %614 = vmatprep.subr.bf16.mxu0 0
    %615 = vmatpush1.bf16.msra.mxu0 0
    %616 = vmatprep.subr.bf16.mxu0 0
    %617 = vmatpush1.bf16.msra.mxu0 0
    %618 = vmatprep.subr.bf16.mxu0 0
    %619 = vmatpush1.bf16.msra.mxu0 0
    %620 = vmatprep.subr.bf16.mxu0 0
    %621 = vmatpush1.bf16.msra.mxu0 0
    %622 = vmatprep.subr.bf16.mxu0 0
    %623 = vmatpush1.bf16.msra.mxu0 0
    %624 = vmatprep.subr.bf16.mxu0 0
    %625 = vmatpush1.bf16.msra.mxu0 0
    %626 = vmatprep.subr.bf16.mxu0 0
    %627 = vmatpush1.bf16.msra.mxu0 0
    %628 = vmatprep.mubr.bf16.mxu0 0
    %629 = vmatmul.mubr.bf16.gmra.mrb[0].mxu0 %v542
    %v630 = vpop.f32.mrb[0].mxu0
    %v631 = vadd.f32 %v516, %v630
    %v632 = vpop.f32.mrb[0].mxu0
    %v633 = vpop.f32.mrb[0].mxu0
    %v634 = vpop.f32.mrb[0].mxu0
    %635 = vdwg.mxu0
    %v640 = vunpack.c.l.b16 %v90
    %v641 = vunpack.c.l.b16 %v91
    %v642 = vunpack.c.l.b16 %v92
    %v643 = vunpack.c.l.b16 %v93
    %v644 = vpack.c.b16 %v641, %v640
    %v645 = vpack.c.b16 %v643, %v642
    %648 = vmatprep.subr.bf16.mxu0 0
    %649 = vmatpush1.bf16.msra.mxu0 %v644
    %650 = vmatprep.subr.bf16.mxu0 0
    %651 = vmatpush1.bf16.msra.mxu0 %v645
    %652 = vmatprep.subr.bf16.mxu0 0
    %653 = vmatpush1.bf16.msra.mxu0 0
    %654 = vmatprep.subr.bf16.mxu0 0
    %655 = vmatpush1.bf16.msra.mxu0 0
    %656 = vmatprep.subr.bf16.mxu0 0
    %657 = vmatpush1.bf16.msra.mxu0 0
    %658 = vmatprep.subr.bf16.mxu0 0
    %659 = vmatpush1.bf16.msra.mxu0 0
    %660 = vmatprep.subr.bf16.mxu0 0
    %661 = vmatpush1.bf16.msra.mxu0 0
    %662 = vmatprep.subr.bf16.mxu0 0
    %663 = vmatpush1.bf16.msra.mxu0 0
    %664 = vmatprep.subr.bf16.mxu0 0
    %665 = vmatpush1.bf16.msra.mxu0 0
    %666 = vmatprep.subr.bf16.mxu0 0
    %667 = vmatpush1.bf16.msra.mxu0 0
    %668 = vmatprep.subr.bf16.mxu0 0
    %669 = vmatpush1.bf16.msra.mxu0 0
    %670 = vmatprep.subr.bf16.mxu0 0
    %671 = vmatpush1.bf16.msra.mxu0 0
    %672 = vmatprep.subr.bf16.mxu0 0
    %673 = vmatpush1.bf16.msra.mxu0 0
    %674 = vmatprep.subr.bf16.mxu0 0
    %675 = vmatpush1.bf16.msra.mxu0 0
    %676 = vmatprep.subr.bf16.mxu0 0
    %677 = vmatpush1.bf16.msra.mxu0 0
    %678 = vmatprep.subr.bf16.mxu0 0
    %679 = vmatpush1.bf16.msra.mxu0 0
    %680 = vmatprep.mubr.bf16.mxu0 0
    %681 = vmatmul.mubr.bf16.gmra.mrb[0].mxu0 %v542
    %v682 = vpop.f32.mrb[0].mxu0
    %v683 = vadd.f32 %v520, %v682
    %v684 = vpop.f32.mrb[0].mxu0
    %v685 = vpop.f32.mrb[0].mxu0
    %v686 = vpop.f32.mrb[0].mxu0
    %687 = vdwg.mxu0
    %v692 = vunpack.c.l.b16 %v94
    %v693 = vunpack.c.l.b16 %v95
    %v694 = vunpack.c.l.b16 %v96
    %v695 = vunpack.c.l.b16 %v97
    %v696 = vpack.c.b16 %v693, %v692
    %v697 = vpack.c.b16 %v695, %v694
    %700 = vmatprep.subr.bf16.mxu0 0
    %701 = vmatpush1.bf16.msra.mxu0 %v696
    %702 = vmatprep.subr.bf16.mxu0 0
    %703 = vmatpush1.bf16.msra.mxu0 %v697
    %704 = vmatprep.subr.bf16.mxu0 0
    %705 = vmatpush1.bf16.msra.mxu0 0
    %706 = vmatprep.subr.bf16.mxu0 0
    %707 = vmatpush1.bf16.msra.mxu0 0
    %708 = vmatprep.subr.bf16.mxu0 0
    %709 = vmatpush1.bf16.msra.mxu0 0
    %710 = vmatprep.subr.bf16.mxu0 0
    %711 = vmatpush1.bf16.msra.mxu0 0
    %712 = vmatprep.subr.bf16.mxu0 0
    %713 = vmatpush1.bf16.msra.mxu0 0
    %714 = vmatprep.subr.bf16.mxu0 0
    %715 = vmatpush1.bf16.msra.mxu0 0
    %716 = vmatprep.subr.bf16.mxu0 0
    %717 = vmatpush1.bf16.msra.mxu0 0
    %718 = vmatprep.subr.bf16.mxu0 0
    %719 = vmatpush1.bf16.msra.mxu0 0
    %720 = vmatprep.subr.bf16.mxu0 0
    %721 = vmatpush1.bf16.msra.mxu0 0
    %722 = vmatprep.subr.bf16.mxu0 0
    %723 = vmatpush1.bf16.msra.mxu0 0
    %724 = vmatprep.subr.bf16.mxu0 0
    %725 = vmatpush1.bf16.msra.mxu0 0
    %726 = vmatprep.subr.bf16.mxu0 0
    %727 = vmatpush1.bf16.msra.mxu0 0
    %728 = vmatprep.subr.bf16.mxu0 0
    %729 = vmatpush1.bf16.msra.mxu0 0
    %730 = vmatprep.subr.bf16.mxu0 0
    %731 = vmatpush1.bf16.msra.mxu0 0
    %732 = vmatprep.mubr.bf16.mxu0 0
    %733 = vmatmul.mubr.bf16.gmra.mrb[0].mxu0 %v542
    %v734 = vpop.f32.mrb[0].mxu0
    %v735 = vadd.f32 %v524, %v734
    %v736 = vpop.f32.mrb[0].mxu0
    %v737 = vpop.f32.mrb[0].mxu0
    %v738 = vpop.f32.mrb[0].mxu0
    %739 = vdwg.mxu0
    %v741 = vsel %vm142, %v65, 0
    %743 = vmatprep.subr.bf16.mxu0 0
    %744 = vmatpush1.bf16.msra.mxu0 %v537
    %745 = vmatprep.subr.bf16.mxu0 0
    %746 = vmatpush1.bf16.msra.mxu0 %v538
    %747 = vmatprep.subr.bf16.mxu0 0
    %748 = vmatpush1.bf16.msra.mxu0 0
    %749 = vmatprep.subr.bf16.mxu0 0
    %750 = vmatpush1.bf16.msra.mxu0 0
    %751 = vmatprep.subr.bf16.mxu0 0
    %752 = vmatpush1.bf16.msra.mxu0 0
    %753 = vmatprep.subr.bf16.mxu0 0
    %754 = vmatpush1.bf16.msra.mxu0 0
    %755 = vmatprep.subr.bf16.mxu0 0
    %756 = vmatpush1.bf16.msra.mxu0 0
    %757 = vmatprep.subr.bf16.mxu0 0
    %758 = vmatpush1.bf16.msra.mxu0 0
    %759 = vmatprep.subr.bf16.mxu0 0
    %760 = vmatpush1.bf16.msra.mxu0 0
    %761 = vmatprep.subr.bf16.mxu0 0
    %762 = vmatpush1.bf16.msra.mxu0 0
    %763 = vmatprep.subr.bf16.mxu0 0
    %764 = vmatpush1.bf16.msra.mxu0 0
    %765 = vmatprep.subr.bf16.mxu0 0
    %766 = vmatpush1.bf16.msra.mxu0 0
    %767 = vmatprep.subr.bf16.mxu0 0
    %768 = vmatpush1.bf16.msra.mxu0 0
    %769 = vmatprep.subr.bf16.mxu0 0
    %770 = vmatpush1.bf16.msra.mxu0 0
    %771 = vmatprep.subr.bf16.mxu0 0
    %772 = vmatpush1.bf16.msra.mxu0 0
    %773 = vmatprep.subr.bf16.mxu0 0
    %774 = vmatpush1.bf16.msra.mxu0 0
    %775 = vmatprep.mubr.bf16.mxu0 0
    %776 = vmatmul.mubr.bf16.gmra.mrb[0].mxu0 %v741
    %v777 = vpop.f32.mrb[0].mxu0
    %v778 = vadd.f32 %v512, %v777
    %v779 = vpop.f32.mrb[0].mxu0
    %v780 = vpop.f32.mrb[0].mxu0
    %v781 = vpop.f32.mrb[0].mxu0
    %782 = vdwg.mxu0
    %783 = vmatprep.subr.bf16.mxu0 0
    %784 = vmatpush1.bf16.msra.mxu0 %v592
    %785 = vmatprep.subr.bf16.mxu0 0
    %786 = vmatpush1.bf16.msra.mxu0 %v593
    %787 = vmatprep.subr.bf16.mxu0 0
    %788 = vmatpush1.bf16.msra.mxu0 0
    %789 = vmatprep.subr.bf16.mxu0 0
    %790 = vmatpush1.bf16.msra.mxu0 0
    %791 = vmatprep.subr.bf16.mxu0 0
    %792 = vmatpush1.bf16.msra.mxu0 0
    %793 = vmatprep.subr.bf16.mxu0 0
    %794 = vmatpush1.bf16.msra.mxu0 0
    %795 = vmatprep.subr.bf16.mxu0 0
    %796 = vmatpush1.bf16.msra.mxu0 0
    %797 = vmatprep.subr.bf16.mxu0 0
    %798 = vmatpush1.bf16.msra.mxu0 0
    %799 = vmatprep.subr.bf16.mxu0 0
    %800 = vmatpush1.bf16.msra.mxu0 0
    %801 = vmatprep.subr.bf16.mxu0 0
    %802 = vmatpush1.bf16.msra.mxu0 0
    %803 = vmatprep.subr.bf16.mxu0 0
    %804 = vmatpush1.bf16.msra.mxu0 0
    %805 = vmatprep.subr.bf16.mxu0 0
    %806 = vmatpush1.bf16.msra.mxu0 0
    %807 = vmatprep.subr.bf16.mxu0 0
    %808 = vmatpush1.bf16.msra.mxu0 0
    %809 = vmatprep.subr.bf16.mxu0 0
    %810 = vmatpush1.bf16.msra.mxu0 0
    %811 = vmatprep.subr.bf16.mxu0 0
    %812 = vmatpush1.bf16.msra.mxu0 0
    %813 = vmatprep.subr.bf16.mxu0 0
    %814 = vmatpush1.bf16.msra.mxu0 0
    %815 = vmatprep.mubr.bf16.mxu0 0
    %816 = vmatmul.mubr.bf16.gmra.mrb[0].mxu0 %v741
    %v817 = vpop.f32.mrb[0].mxu0
    %v818 = vadd.f32 %v516, %v817
    %v819 = vpop.f32.mrb[0].mxu0
    %v820 = vpop.f32.mrb[0].mxu0
    %v821 = vpop.f32.mrb[0].mxu0
    %822 = vdwg.mxu0
    %823 = vmatprep.subr.bf16.mxu0 0
    %824 = vmatpush1.bf16.msra.mxu0 %v644
    %825 = vmatprep.subr.bf16.mxu0 0
    %826 = vmatpush1.bf16.msra.mxu0 %v645
    %827 = vmatprep.subr.bf16.mxu0 0
    %828 = vmatpush1.bf16.msra.mxu0 0
    %829 = vmatprep.subr.bf16.mxu0 0
    %830 = vmatpush1.bf16.msra.mxu0 0
    %831 = vmatprep.subr.bf16.mxu0 0
    %832 = vmatpush1.bf16.msra.mxu0 0
    %833 = vmatprep.subr.bf16.mxu0 0
    %834 = vmatpush1.bf16.msra.mxu0 0
    %835 = vmatprep.subr.bf16.mxu0 0
    %836 = vmatpush1.bf16.msra.mxu0 0
    %837 = vmatprep.subr.bf16.mxu0 0
    %838 = vmatpush1.bf16.msra.mxu0 0
    %839 = vmatprep.subr.bf16.mxu0 0
    %840 = vmatpush1.bf16.msra.mxu0 0
    %841 = vmatprep.subr.bf16.mxu0 0
    %842 = vmatpush1.bf16.msra.mxu0 0
    %843 = vmatprep.subr.bf16.mxu0 0
    %844 = vmatpush1.bf16.msra.mxu0 0
    %845 = vmatprep.subr.bf16.mxu0 0
    %846 = vmatpush1.bf16.msra.mxu0 0
    %847 = vmatprep.subr.bf16.mxu0 0
    %848 = vmatpush1.bf16.msra.mxu0 0
    %849 = vmatprep.subr.bf16.mxu0 0
    %850 = vmatpush1.bf16.msra.mxu0 0
    %851 = vmatprep.subr.bf16.mxu0 0
    %852 = vmatpush1.bf16.msra.mxu0 0
    %853 = vmatprep.subr.bf16.mxu0 0
    %854 = vmatpush1.bf16.msra.mxu0 0
    %855 = vmatprep.mubr.bf16.mxu0 0
    %856 = vmatmul.mubr.bf16.gmra.mrb[0].mxu0 %v741
    %v857 = vpop.f32.mrb[0].mxu0
    %v858 = vadd.f32 %v520, %v857
    %v859 = vpop.f32.mrb[0].mxu0
    %v860 = vpop.f32.mrb[0].mxu0
    %v861 = vpop.f32.mrb[0].mxu0
    %862 = vdwg.mxu0
    %863 = vmatprep.subr.bf16.mxu0 0
    %864 = vmatpush1.bf16.msra.mxu0 %v696
    %865 = vmatprep.subr.bf16.mxu0 0
    %866 = vmatpush1.bf16.msra.mxu0 %v697
    %867 = vmatprep.subr.bf16.mxu0 0
    %868 = vmatpush1.bf16.msra.mxu0 0
    %869 = vmatprep.subr.bf16.mxu0 0
    %870 = vmatpush1.bf16.msra.mxu0 0
    %871 = vmatprep.subr.bf16.mxu0 0
    %872 = vmatpush1.bf16.msra.mxu0 0
    %873 = vmatprep.subr.bf16.mxu0 0
    %874 = vmatpush1.bf16.msra.mxu0 0
    %875 = vmatprep.subr.bf16.mxu0 0
    %876 = vmatpush1.bf16.msra.mxu0 0
    %877 = vmatprep.subr.bf16.mxu0 0
    %878 = vmatpush1.bf16.msra.mxu0 0
    %879 = vmatprep.subr.bf16.mxu0 0
    %880 = vmatpush1.bf16.msra.mxu0 0
    %881 = vmatprep.subr.bf16.mxu0 0
    %882 = vmatpush1.bf16.msra.mxu0 0
    %883 = vmatprep.subr.bf16.mxu0 0
    %884 = vmatpush1.bf16.msra.mxu0 0
    %885 = vmatprep.subr.bf16.mxu0 0
    %886 = vmatpush1.bf16.msra.mxu0 0
    %887 = vmatprep.subr.bf16.mxu0 0
    %888 = vmatpush1.bf16.msra.mxu0 0
    %889 = vmatprep.subr.bf16.mxu0 0
    %890 = vmatpush1.bf16.msra.mxu0 0
    %891 = vmatprep.subr.bf16.mxu0 0
    %892 = vmatpush1.bf16.msra.mxu0 0
    %893 = vmatprep.subr.bf16.mxu0 0
    %894 = vmatpush1.bf16.msra.mxu0 0
    %895 = vmatprep.mubr.bf16.mxu0 0
    %896 = vmatmul.mubr.bf16.gmra.mrb[0].mxu0 %v741
    %v897 = vpop.f32.mrb[0].mxu0
    %v898 = vadd.f32 %v524, %v897
    %v899 = vpop.f32.mrb[0].mxu0
    %v900 = vpop.f32.mrb[0].mxu0
    %v901 = vpop.f32.mrb[0].mxu0
    %902 = vdwg.mxu0
    %v903 = vmul.f32 %v181, 0.35355338
    %v904 = vmul.f32 %v233, 0.35355338
    %v905 = vmul.f32 %v285, 0.35355338
    %v906 = vmul.f32 %v337, 0.35355338
    %v907 = vmul.f32 %v380, 0.35355338
    %v908 = vmul.f32 %v420, 0.35355338
    %v909 = vmul.f32 %v460, 0.35355338
    %v910 = vmul.f32 %v500, 0.35355338
    %v911 = vpack.c.bf16 %v903, %v903
    %v912 = vpack.c.bf16 %v904, %v904
    %v913 = vpack.c.bf16 %v905, %v905
    %v914 = vpack.c.bf16 %v906, %v906
    %v915 = vpack.c.bf16 %v907, %v907
    %v916 = vpack.c.bf16 %v908, %v908
    %v917 = vpack.c.bf16 %v909, %v909
    %v918 = vpack.c.bf16 %v910, %v910
    %v919 = vpack.c.bf16 %v579, %v579
    %v920 = vpack.c.bf16 %v631, %v631
    %v921 = vpack.c.bf16 %v683, %v683
    %v922 = vpack.c.bf16 %v735, %v735
    %v923 = vpack.c.bf16 %v778, %v778
    %v924 = vpack.c.bf16 %v818, %v818
    %v925 = vpack.c.bf16 %v858, %v858
    %v926 = vpack.c.bf16 %v898, %v898
    %vm927 = vcmask 64512
    %v929 = vsel %vm927, %v911, 0
    %v932 = vsel %vm927, %v919, 0
    %934 = vmatprep.subr.bf16.mxu0 0
    %935 = vmatpush1.bf16.xpose.msra.mxu0 %v932
    %936 = vmatprep.subr.bf16.mxu0 0
    %937 = vmatpush1.bf16.xpose.msra.mxu0 0
    %938 = vmatprep.subr.bf16.mxu0 0
    %939 = vmatpush1.bf16.xpose.msra.mxu0 0
    %940 = vmatprep.subr.bf16.mxu0 0
    %941 = vmatpush1.bf16.xpose.msra.mxu0 0
    %942 = vmatprep.subr.bf16.mxu0 0
    %943 = vmatpush1.bf16.xpose.msra.mxu0 0
    %944 = vmatprep.subr.bf16.mxu0 0
    %945 = vmatpush1.bf16.xpose.msra.mxu0 0
    %946 = vmatprep.subr.bf16.mxu0 0
    %947 = vmatpush1.bf16.xpose.msra.mxu0 0
    %948 = vmatprep.subr.bf16.mxu0 0
    %949 = vmatpush1.bf16.xpose.msra.mxu0 0
    %950 = vmatprep.subr.bf16.mxu0 0
    %951 = vmatpush1.bf16.xpose.msra.mxu0 0
    %952 = vmatprep.subr.bf16.mxu0 0
    %953 = vmatpush1.bf16.xpose.msra.mxu0 0
    %954 = vmatprep.subr.bf16.mxu0 0
    %955 = vmatpush1.bf16.xpose.msra.mxu0 0
    %956 = vmatprep.subr.bf16.mxu0 0
    %957 = vmatpush1.bf16.xpose.msra.mxu0 0
    %958 = vmatprep.subr.bf16.mxu0 0
    %959 = vmatpush1.bf16.xpose.msra.mxu0 0
    %960 = vmatprep.subr.bf16.mxu0 0
    %961 = vmatpush1.bf16.xpose.msra.mxu0 0
    %962 = vmatprep.subr.bf16.mxu0 0
    %963 = vmatpush1.bf16.xpose.msra.mxu0 0
    %964 = vmatprep.subr.bf16.mxu0 0
    %965 = vmatpush1.bf16.xpose.msra.mxu0 0
    %966 = vmatprep.mubr.bf16.mxu0 0
    %967 = vmatmul.mubr.bf16.gmra.mrb[0].mxu0 %v929
    %v968 = vpop.f32.mrb[0].mxu0
    %v969 = vadd.f32 0.0, %v968
    %v970 = vpop.f32.mrb[0].mxu0
    %v971 = vpop.f32.mrb[0].mxu0
    %v972 = vpop.f32.mrb[0].mxu0
    %973 = vdwg.mxu0
    %v975 = vsel %vm927, %v912, 0
    %v978 = vsel %vm927, %v920, 0
    %980 = vmatprep.subr.bf16.mxu0 0
    %981 = vmatpush1.bf16.xpose.msra.mxu0 %v978
    %982 = vmatprep.subr.bf16.mxu0 0
    %983 = vmatpush1.bf16.xpose.msra.mxu0 0
    %984 = vmatprep.subr.bf16.mxu0 0
    %985 = vmatpush1.bf16.xpose.msra.mxu0 0
    %986 = vmatprep.subr.bf16.mxu0 0
    %987 = vmatpush1.bf16.xpose.msra.mxu0 0
    %988 = vmatprep.subr.bf16.mxu0 0
    %989 = vmatpush1.bf16.xpose.msra.mxu0 0
    %990 = vmatprep.subr.bf16.mxu0 0
    %991 = vmatpush1.bf16.xpose.msra.mxu0 0
    %992 = vmatprep.subr.bf16.mxu0 0
    %993 = vmatpush1.bf16.xpose.msra.mxu0 0
    %994 = vmatprep.subr.bf16.mxu0 0
    %995 = vmatpush1.bf16.xpose.msra.mxu0 0
    %996 = vmatprep.subr.bf16.mxu0 0
    %997 = vmatpush1.bf16.xpose.msra.mxu0 0
    %998 = vmatprep.subr.bf16.mxu0 0
    %999 = vmatpush1.bf16.xpose.msra.mxu0 0
    %1000 = vmatprep.subr.bf16.mxu0 0
    %1001 = vmatpush1.bf16.xpose.msra.mxu0 0
    %1002 = vmatprep.subr.bf16.mxu0 0
    %1003 = vmatpush1.bf16.xpose.msra.mxu0 0
    %1004 = vmatprep.subr.bf16.mxu0 0
    %1005 = vmatpush1.bf16.xpose.msra.mxu0 0
    %1006 = vmatprep.subr.bf16.mxu0 0
    %1007 = vmatpush1.bf16.xpose.msra.mxu0 0
    %1008 = vmatprep.subr.bf16.mxu0 0
    %1009 = vmatpush1.bf16.xpose.msra.mxu0 0
    %1010 = vmatprep.subr.bf16.mxu0 0
    %1011 = vmatpush1.bf16.xpose.msra.mxu0 0
    %1012 = vmatprep.mubr.bf16.mxu0 0
    %1013 = vmatmul.mubr.bf16.gmra.mrb[0].mxu0 %v975
    %v1014 = vpop.f32.mrb[0].mxu0
    %v1015 = vadd.f32 0.0, %v1014
    %v1016 = vpop.f32.mrb[0].mxu0
    %v1017 = vpop.f32.mrb[0].mxu0
    %v1018 = vpop.f32.mrb[0].mxu0
    %1019 = vdwg.mxu0
    %v1021 = vsel %vm927, %v913, 0
    %v1024 = vsel %vm927, %v921, 0
    %1026 = vmatprep.subr.bf16.mxu0 0
    %1027 = vmatpush1.bf16.xpose.msra.mxu0 %v1024
    %1028 = vmatprep.subr.bf16.mxu0 0
    %1029 = vmatpush1.bf16.xpose.msra.mxu0 0
    %1030 = vmatprep.subr.bf16.mxu0 0
    %1031 = vmatpush1.bf16.xpose.msra.mxu0 0
    %1032 = vmatprep.subr.bf16.mxu0 0
    %1033 = vmatpush1.bf16.xpose.msra.mxu0 0
    %1034 = vmatprep.subr.bf16.mxu0 0
    %1035 = vmatpush1.bf16.xpose.msra.mxu0 0
    %1036 = vmatprep.subr.bf16.mxu0 0
    %1037 = vmatpush1.bf16.xpose.msra.mxu0 0
    %1038 = vmatprep.subr.bf16.mxu0 0
    %1039 = vmatpush1.bf16.xpose.msra.mxu0 0
    %1040 = vmatprep.subr.bf16.mxu0 0
    %1041 = vmatpush1.bf16.xpose.msra.mxu0 0
    %1042 = vmatprep.subr.bf16.mxu0 0
    %1043 = vmatpush1.bf16.xpose.msra.mxu0 0
    %1044 = vmatprep.subr.bf16.mxu0 0
    %1045 = vmatpush1.bf16.xpose.msra.mxu0 0
    %1046 = vmatprep.subr.bf16.mxu0 0
    %1047 = vmatpush1.bf16.xpose.msra.mxu0 0
    %1048 = vmatprep.subr.bf16.mxu0 0
    %1049 = vmatpush1.bf16.xpose.msra.mxu0 0
    %1050 = vmatprep.subr.bf16.mxu0 0
    %1051 = vmatpush1.bf16.xpose.msra.mxu0 0
    %1052 = vmatprep.subr.bf16.mxu0 0
    %1053 = vmatpush1.bf16.xpose.msra.mxu0 0
    %1054 = vmatprep.subr.bf16.mxu0 0
    %1055 = vmatpush1.bf16.xpose.msra.mxu0 0
    %1056 = vmatprep.subr.bf16.mxu0 0
    %1057 = vmatpush1.bf16.xpose.msra.mxu0 0
    %1058 = vmatprep.mubr.bf16.mxu0 0
    %1059 = vmatmul.mubr.bf16.gmra.mrb[0].mxu0 %v1021
    %v1060 = vpop.f32.mrb[0].mxu0
    %v1061 = vadd.f32 0.0, %v1060
    %v1062 = vpop.f32.mrb[0].mxu0
    %v1063 = vpop.f32.mrb[0].mxu0
    %v1064 = vpop.f32.mrb[0].mxu0
    %1065 = vdwg.mxu0
    %v1067 = vsel %vm927, %v914, 0
    %v1070 = vsel %vm927, %v922, 0
    %1072 = vmatprep.subr.bf16.mxu0 0
    %1073 = vmatpush1.bf16.xpose.msra.mxu0 %v1070
    %1074 = vmatprep.subr.bf16.mxu0 0
    %1075 = vmatpush1.bf16.xpose.msra.mxu0 0
    %1076 = vmatprep.subr.bf16.mxu0 0
    %1077 = vmatpush1.bf16.xpose.msra.mxu0 0
    %1078 = vmatprep.subr.bf16.mxu0 0
    %1079 = vmatpush1.bf16.xpose.msra.mxu0 0
    %1080 = vmatprep.subr.bf16.mxu0 0
    %1081 = vmatpush1.bf16.xpose.msra.mxu0 0
    %1082 = vmatprep.subr.bf16.mxu0 0
    %1083 = vmatpush1.bf16.xpose.msra.mxu0 0
    %1084 = vmatprep.subr.bf16.mxu0 0
    %1085 = vmatpush1.bf16.xpose.msra.mxu0 0
    %1086 = vmatprep.subr.bf16.mxu0 0
    %1087 = vmatpush1.bf16.xpose.msra.mxu0 0
    %1088 = vmatprep.subr.bf16.mxu0 0
    %1089 = vmatpush1.bf16.xpose.msra.mxu0 0
    %1090 = vmatprep.subr.bf16.mxu0 0
    %1091 = vmatpush1.bf16.xpose.msra.mxu0 0
    %1092 = vmatprep.subr.bf16.mxu0 0
    %1093 = vmatpush1.bf16.xpose.msra.mxu0 0
    %1094 = vmatprep.subr.bf16.mxu0 0
    %1095 = vmatpush1.bf16.xpose.msra.mxu0 0
    %1096 = vmatprep.subr.bf16.mxu0 0
    %1097 = vmatpush1.bf16.xpose.msra.mxu0 0
    %1098 = vmatprep.subr.bf16.mxu0 0
    %1099 = vmatpush1.bf16.xpose.msra.mxu0 0
    %1100 = vmatprep.subr.bf16.mxu0 0
    %1101 = vmatpush1.bf16.xpose.msra.mxu0 0
    %1102 = vmatprep.subr.bf16.mxu0 0
    %1103 = vmatpush1.bf16.xpose.msra.mxu0 0
    %1104 = vmatprep.mubr.bf16.mxu0 0
    %1105 = vmatmul.mubr.bf16.gmra.mrb[0].mxu0 %v1067
    %v1106 = vpop.f32.mrb[0].mxu0
    %v1107 = vadd.f32 0.0, %v1106
    %v1108 = vpop.f32.mrb[0].mxu0
    %v1109 = vpop.f32.mrb[0].mxu0
    %v1110 = vpop.f32.mrb[0].mxu0
    %1111 = vdwg.mxu0
    %v1113 = vsel %vm927, %v915, 0
    %v1116 = vsel %vm927, %v923, 0
    %1118 = vmatprep.subr.bf16.mxu0 0
    %1119 = vmatpush1.bf16.xpose.msra.mxu0 %v1116
    %1120 = vmatprep.subr.bf16.mxu0 0
    %1121 = vmatpush1.bf16.xpose.msra.mxu0 0
    %1122 = vmatprep.subr.bf16.mxu0 0
    %1123 = vmatpush1.bf16.xpose.msra.mxu0 0
    %1124 = vmatprep.subr.bf16.mxu0 0
    %1125 = vmatpush1.bf16.xpose.msra.mxu0 0
    %1126 = vmatprep.subr.bf16.mxu0 0
    %1127 = vmatpush1.bf16.xpose.msra.mxu0 0
    %1128 = vmatprep.subr.bf16.mxu0 0
    %1129 = vmatpush1.bf16.xpose.msra.mxu0 0
    %1130 = vmatprep.subr.bf16.mxu0 0
    %1131 = vmatpush1.bf16.xpose.msra.mxu0 0
    %1132 = vmatprep.subr.bf16.mxu0 0
    %1133 = vmatpush1.bf16.xpose.msra.mxu0 0
    %1134 = vmatprep.subr.bf16.mxu0 0
    %1135 = vmatpush1.bf16.xpose.msra.mxu0 0
    %1136 = vmatprep.subr.bf16.mxu0 0
    %1137 = vmatpush1.bf16.xpose.msra.mxu0 0
    %1138 = vmatprep.subr.bf16.mxu0 0
    %1139 = vmatpush1.bf16.xpose.msra.mxu0 0
    %1140 = vmatprep.subr.bf16.mxu0 0
    %1141 = vmatpush1.bf16.xpose.msra.mxu0 0
    %1142 = vmatprep.subr.bf16.mxu0 0
    %1143 = vmatpush1.bf16.xpose.msra.mxu0 0
    %1144 = vmatprep.subr.bf16.mxu0 0
    %1145 = vmatpush1.bf16.xpose.msra.mxu0 0
    %1146 = vmatprep.subr.bf16.mxu0 0
    %1147 = vmatpush1.bf16.xpose.msra.mxu0 0
    %1148 = vmatprep.subr.bf16.mxu0 0
    %1149 = vmatpush1.bf16.xpose.msra.mxu0 0
    %1150 = vmatprep.mubr.bf16.mxu0 0
    %1151 = vmatmul.mubr.bf16.gmra.mrb[0].mxu0 %v1113
    %v1152 = vpop.f32.mrb[0].mxu0
    %v1153 = vadd.f32 0.0, %v1152
    %v1154 = vpop.f32.mrb[0].mxu0
    %v1155 = vpop.f32.mrb[0].mxu0
    %v1156 = vpop.f32.mrb[0].mxu0
    %1157 = vdwg.mxu0
    %v1159 = vsel %vm927, %v916, 0
    %v1162 = vsel %vm927, %v924, 0
    %1164 = vmatprep.subr.bf16.mxu0 0
    %1165 = vmatpush1.bf16.xpose.msra.mxu0 %v1162
    %1166 = vmatprep.subr.bf16.mxu0 0
    %1167 = vmatpush1.bf16.xpose.msra.mxu0 0
    %1168 = vmatprep.subr.bf16.mxu0 0
    %1169 = vmatpush1.bf16.xpose.msra.mxu0 0
    %1170 = vmatprep.subr.bf16.mxu0 0
    %1171 = vmatpush1.bf16.xpose.msra.mxu0 0
    %1172 = vmatprep.subr.bf16.mxu0 0
    %1173 = vmatpush1.bf16.xpose.msra.mxu0 0
    %1174 = vmatprep.subr.bf16.mxu0 0
    %1175 = vmatpush1.bf16.xpose.msra.mxu0 0
    %1176 = vmatprep.subr.bf16.mxu0 0
    %1177 = vmatpush1.bf16.xpose.msra.mxu0 0
    %1178 = vmatprep.subr.bf16.mxu0 0
    %1179 = vmatpush1.bf16.xpose.msra.mxu0 0
    %1180 = vmatprep.subr.bf16.mxu0 0
    %1181 = vmatpush1.bf16.xpose.msra.mxu0 0
    %1182 = vmatprep.subr.bf16.mxu0 0
    %1183 = vmatpush1.bf16.xpose.msra.mxu0 0
    %1184 = vmatprep.subr.bf16.mxu0 0
    %1185 = vmatpush1.bf16.xpose.msra.mxu0 0
    %1186 = vmatprep.subr.bf16.mxu0 0
    %1187 = vmatpush1.bf16.xpose.msra.mxu0 0
    %1188 = vmatprep.subr.bf16.mxu0 0
    %1189 = vmatpush1.bf16.xpose.msra.mxu0 0
    %1190 = vmatprep.subr.bf16.mxu0 0
    %1191 = vmatpush1.bf16.xpose.msra.mxu0 0
    %1192 = vmatprep.subr.bf16.mxu0 0
    %1193 = vmatpush1.bf16.xpose.msra.mxu0 0
    %1194 = vmatprep.subr.bf16.mxu0 0
    %1195 = vmatpush1.bf16.xpose.msra.mxu0 0
    %1196 = vmatprep.mubr.bf16.mxu0 0
    %1197 = vmatmul.mubr.bf16.gmra.mrb[0].mxu0 %v1159
    %v1198 = vpop.f32.mrb[0].mxu0
    %v1199 = vadd.f32 0.0, %v1198
    %v1200 = vpop.f32.mrb[0].mxu0
    %v1201 = vpop.f32.mrb[0].mxu0
    %v1202 = vpop.f32.mrb[0].mxu0
    %1203 = vdwg.mxu0
    %v1205 = vsel %vm927, %v917, 0
    %v1208 = vsel %vm927, %v925, 0
    %1210 = vmatprep.subr.bf16.mxu0 0
    %1211 = vmatpush1.bf16.xpose.msra.mxu0 %v1208
    %1212 = vmatprep.subr.bf16.mxu0 0
    %1213 = vmatpush1.bf16.xpose.msra.mxu0 0
    %1214 = vmatprep.subr.bf16.mxu0 0
    %1215 = vmatpush1.bf16.xpose.msra.mxu0 0
    %1216 = vmatprep.subr.bf16.mxu0 0
    %1217 = vmatpush1.bf16.xpose.msra.mxu0 0
    %1218 = vmatprep.subr.bf16.mxu0 0
    %1219 = vmatpush1.bf16.xpose.msra.mxu0 0
    %1220 = vmatprep.subr.bf16.mxu0 0
    %1221 = vmatpush1.bf16.xpose.msra.mxu0 0
    %1222 = vmatprep.subr.bf16.mxu0 0
    %1223 = vmatpush1.bf16.xpose.msra.mxu0 0
    %1224 = vmatprep.subr.bf16.mxu0 0
    %1225 = vmatpush1.bf16.xpose.msra.mxu0 0
    %1226 = vmatprep.subr.bf16.mxu0 0
    %1227 = vmatpush1.bf16.xpose.msra.mxu0 0
    %1228 = vmatprep.subr.bf16.mxu0 0
    %1229 = vmatpush1.bf16.xpose.msra.mxu0 0
    %1230 = vmatprep.subr.bf16.mxu0 0
    %1231 = vmatpush1.bf16.xpose.msra.mxu0 0
    %1232 = vmatprep.subr.bf16.mxu0 0
    %1233 = vmatpush1.bf16.xpose.msra.mxu0 0
    %1234 = vmatprep.subr.bf16.mxu0 0
    %1235 = vmatpush1.bf16.xpose.msra.mxu0 0
    %1236 = vmatprep.subr.bf16.mxu0 0
    %1237 = vmatpush1.bf16.xpose.msra.mxu0 0
    %1238 = vmatprep.subr.bf16.mxu0 0
    %1239 = vmatpush1.bf16.xpose.msra.mxu0 0
    %1240 = vmatprep.subr.bf16.mxu0 0
    %1241 = vmatpush1.bf16.xpose.msra.mxu0 0
    %1242 = vmatprep.mubr.bf16.mxu0 0
    %1243 = vmatmul.mubr.bf16.gmra.mrb[0].mxu0 %v1205
    %v1244 = vpop.f32.mrb[0].mxu0
    %v1245 = vadd.f32 0.0, %v1244
    %v1246 = vpop.f32.mrb[0].mxu0
    %v1247 = vpop.f32.mrb[0].mxu0
    %v1248 = vpop.f32.mrb[0].mxu0
    %1249 = vdwg.mxu0
    %v1251 = vsel %vm927, %v918, 0
    %v1254 = vsel %vm927, %v926, 0
    %1256 = vmatprep.subr.bf16.mxu0 0
    %1257 = vmatpush1.bf16.xpose.msra.mxu0 %v1254
    %1258 = vmatprep.subr.bf16.mxu0 0
    %1259 = vmatpush1.bf16.xpose.msra.mxu0 0
    %1260 = vmatprep.subr.bf16.mxu0 0
    %1261 = vmatpush1.bf16.xpose.msra.mxu0 0
    %1262 = vmatprep.subr.bf16.mxu0 0
    %1263 = vmatpush1.bf16.xpose.msra.mxu0 0
    %1264 = vmatprep.subr.bf16.mxu0 0
    %1265 = vmatpush1.bf16.xpose.msra.mxu0 0
    %1266 = vmatprep.subr.bf16.mxu0 0
    %1267 = vmatpush1.bf16.xpose.msra.mxu0 0
    %1268 = vmatprep.subr.bf16.mxu0 0
    %1269 = vmatpush1.bf16.xpose.msra.mxu0 0
    %1270 = vmatprep.subr.bf16.mxu0 0
    %1271 = vmatpush1.bf16.xpose.msra.mxu0 0
    %1272 = vmatprep.subr.bf16.mxu0 0
    %1273 = vmatpush1.bf16.xpose.msra.mxu0 0
    %1274 = vmatprep.subr.bf16.mxu0 0
    %1275 = vmatpush1.bf16.xpose.msra.mxu0 0
    %1276 = vmatprep.subr.bf16.mxu0 0
    %1277 = vmatpush1.bf16.xpose.msra.mxu0 0
    %1278 = vmatprep.subr.bf16.mxu0 0
    %1279 = vmatpush1.bf16.xpose.msra.mxu0 0
    %1280 = vmatprep.subr.bf16.mxu0 0
    %1281 = vmatpush1.bf16.xpose.msra.mxu0 0
    %1282 = vmatprep.subr.bf16.mxu0 0
    %1283 = vmatpush1.bf16.xpose.msra.mxu0 0
    %1284 = vmatprep.subr.bf16.mxu0 0
    %1285 = vmatpush1.bf16.xpose.msra.mxu0 0
    %1286 = vmatprep.subr.bf16.mxu0 0
    %1287 = vmatpush1.bf16.xpose.msra.mxu0 0
    %1288 = vmatprep.mubr.bf16.mxu0 0
    %1289 = vmatmul.mubr.bf16.gmra.mrb[0].mxu0 %v1251
    %v1290 = vpop.f32.mrb[0].mxu0
    %v1291 = vadd.f32 0.0, %v1290
    %v1292 = vpop.f32.mrb[0].mxu0
    %v1293 = vpop.f32.mrb[0].mxu0
    %v1294 = vpop.f32.mrb[0].mxu0
    %1295 = vdwg.mxu0
    %v1296 = vsel %vm927, %v969, -inf
    %1297 = vmax.xlane.f32.xlu0 %v1296
    %v1298 = vpop.xlane.xlu0 %1297
    %v1299 = vsel %vm927, %v1015, -inf
    %1300 = vmax.xlane.f32.xlu0 %v1299
    %v1301 = vpop.xlane.xlu0 %1300
    %v1302 = vsel %vm927, %v1061, -inf
    %1303 = vmax.xlane.f32.xlu0 %v1302
    %v1304 = vpop.xlane.xlu0 %1303
    %v1305 = vsel %vm927, %v1107, -inf
    %1306 = vmax.xlane.f32.xlu0 %v1305
    %v1307 = vpop.xlane.xlu0 %1306
    %v1308 = vsel %vm927, %v1153, -inf
    %1309 = vmax.xlane.f32.xlu0 %v1308
    %v1310 = vpop.xlane.xlu0 %1309
    %v1311 = vsel %vm927, %v1199, -inf
    %1312 = vmax.xlane.f32.xlu0 %v1311
    %v1313 = vpop.xlane.xlu0 %1312
    %v1314 = vsel %vm927, %v1245, -inf
    %1315 = vmax.xlane.f32.xlu0 %v1314
    %v1316 = vpop.xlane.xlu0 %1315
    %v1317 = vsel %vm927, %v1291, -inf
    %1318 = vmax.xlane.f32.xlu0 %v1317
    %v1319 = vpop.xlane.xlu0 %1318
    %v1320 = vsub.f32 %v969, %v1298
    %v1321 = vsub.f32 %v1015, %v1301
    %v1322 = vsub.f32 %v1061, %v1304
    %v1323 = vsub.f32 %v1107, %v1307
    %v1324 = vsub.f32 %v1153, %v1310
    %v1325 = vsub.f32 %v1199, %v1313
    %v1326 = vsub.f32 %v1245, %v1316
    %v1327 = vsub.f32 %v1291, %v1319
    %v1328 = vmul.f32 %v1320, 1.442695
    %v1329 = vpow.pop %v1328
    %v1330 = vmul.f32 %v1321, 1.442695
    %v1331 = vpow.pop %v1330
    %v1332 = vmul.f32 %v1322, 1.442695
    %v1333 = vpow.pop %v1332
    %v1334 = vmul.f32 %v1323, 1.442695
    %v1335 = vpow.pop %v1334
    %v1336 = vmul.f32 %v1324, 1.442695
    %v1337 = vpow.pop %v1336
    %v1338 = vmul.f32 %v1325, 1.442695
    %v1339 = vpow.pop %v1338
    %v1340 = vmul.f32 %v1326, 1.442695
    %v1341 = vpow.pop %v1340
    %v1342 = vmul.f32 %v1327, 1.442695
    %v1343 = vpow.pop %v1342
    %v1344 = vsel %vm927, %v1329, 0.0
    %1345 = vadd.xlane.f32.xlu0 %v1344
    %v1346 = vpop.xlane.xlu0 %1345
    %v1347 = vsel %vm927, %v1331, 0.0
    %1348 = vadd.xlane.f32.xlu0 %v1347
    %v1349 = vpop.xlane.xlu0 %1348
    %v1350 = vsel %vm927, %v1333, 0.0
    %1351 = vadd.xlane.f32.xlu0 %v1350
    %v1352 = vpop.xlane.xlu0 %1351
    %v1353 = vsel %vm927, %v1335, 0.0
    %1354 = vadd.xlane.f32.xlu0 %v1353
    %v1355 = vpop.xlane.xlu0 %1354
    %v1356 = vsel %vm927, %v1337, 0.0
    %1357 = vadd.xlane.f32.xlu0 %v1356
    %v1358 = vpop.xlane.xlu0 %1357
    %v1359 = vsel %vm927, %v1339, 0.0
    %1360 = vadd.xlane.f32.xlu0 %v1359
    %v1361 = vpop.xlane.xlu0 %1360
    %v1362 = vsel %vm927, %v1341, 0.0
    %1363 = vadd.xlane.f32.xlu0 %v1362
    %v1364 = vpop.xlane.xlu0 %1363
    %v1365 = vsel %vm927, %v1343, 0.0
    %1366 = vadd.xlane.f32.xlu0 %v1365
    %v1367 = vpop.xlane.xlu0 %1366
    %v1368 = vrcp.pop %v1346
    %v1369 = vrcp.pop %v1349
    %v1370 = vrcp.pop %v1352
    %v1371 = vrcp.pop %v1355
    %v1372 = vrcp.pop %v1358
    %v1373 = vrcp.pop %v1361
    %v1374 = vrcp.pop %v1364
    %v1375 = vrcp.pop %v1367
    %v1376 = vmul.f32 %v1329, %v1368
    %v1377 = vmul.f32 %v1331, %v1369
    %v1378 = vmul.f32 %v1333, %v1370
    %v1379 = vmul.f32 %v1335, %v1371
    %v1380 = vmul.f32 %v1337, %v1372
    %v1381 = vmul.f32 %v1339, %v1373
    %v1382 = vmul.f32 %v1341, %v1374
    %v1383 = vmul.f32 %v1343, %v1375
    %v1384 = vpack.c.bf16 %v1376, %v1376
    %v1385 = vpack.c.bf16 %v1377, %v1377
    %v1386 = vpack.c.bf16 %v1378, %v1378
    %v1387 = vpack.c.bf16 %v1379, %v1379
    %v1388 = vpack.c.bf16 %v1380, %v1380
    %v1389 = vpack.c.bf16 %v1381, %v1381
    %v1390 = vpack.c.bf16 %v1382, %v1382
    %v1391 = vpack.c.bf16 %v1383, %v1383
    %1393 = vrot.lane.b32.xlu0 %v919, 120
    %v1394 = vpop.permute.xlu0 %1393
    %v1396 = vsel %vm927, %v1384, 0
    %vm1398 = vcmask 1043456
    %v1400 = vsel %vm1398, %v1394, 0
    %1402 = vmatprep.subr.bf16.mxu0 0
    %1403 = vmatpush1.bf16.msra.mxu0 %v1400
    %1404 = vmatprep.subr.bf16.mxu0 0
    %1405 = vmatpush1.bf16.msra.mxu0 0
    %1406 = vmatprep.subr.bf16.mxu0 0
    %1407 = vmatpush1.bf16.msra.mxu0 0
    %1408 = vmatprep.subr.bf16.mxu0 0
    %1409 = vmatpush1.bf16.msra.mxu0 0
    %1410 = vmatprep.subr.bf16.mxu0 0
    %1411 = vmatpush1.bf16.msra.mxu0 0
    %1412 = vmatprep.subr.bf16.mxu0 0
    %1413 = vmatpush1.bf16.msra.mxu0 0
    %1414 = vmatprep.subr.bf16.mxu0 0
    %1415 = vmatpush1.bf16.msra.mxu0 0
    %1416 = vmatprep.subr.bf16.mxu0 0
    %1417 = vmatpush1.bf16.msra.mxu0 0
    %1418 = vmatprep.subr.bf16.mxu0 0
    %1419 = vmatpush1.bf16.msra.mxu0 0
    %1420 = vmatprep.subr.bf16.mxu0 0
    %1421 = vmatpush1.bf16.msra.mxu0 0
    %1422 = vmatprep.subr.bf16.mxu0 0
    %1423 = vmatpush1.bf16.msra.mxu0 0
    %1424 = vmatprep.subr.bf16.mxu0 0
    %1425 = vmatpush1.bf16.msra.mxu0 0
    %1426 = vmatprep.subr.bf16.mxu0 0
    %1427 = vmatpush1.bf16.msra.mxu0 0
    %1428 = vmatprep.subr.bf16.mxu0 0
    %1429 = vmatpush1.bf16.msra.mxu0 0
    %1430 = vmatprep.subr.bf16.mxu0 0
    %1431 = vmatpush1.bf16.msra.mxu0 0
    %1432 = vmatprep.subr.bf16.mxu0 0
    %1433 = vmatpush1.bf16.msra.mxu0 0
    %1434 = vmatprep.mubr.bf16.mxu0 0
    %1435 = vmatmul.mubr.bf16.gmra.mrb[0].mxu0 %v1396
    %v1436 = vpop.f32.mrb[0].mxu0
    %v1437 = vadd.f32 0.0, %v1436
    %v1438 = vpop.f32.mrb[0].mxu0
    %v1439 = vpop.f32.mrb[0].mxu0
    %v1440 = vpop.f32.mrb[0].mxu0
    %1441 = vdwg.mxu0
    %1443 = vrot.lane.b32.xlu0 %v920, 120
    %v1444 = vpop.permute.xlu0 %1443
    %v1446 = vsel %vm927, %v1385, 0
    %v1449 = vsel %vm1398, %v1444, 0
    %1451 = vmatprep.subr.bf16.mxu0 0
    %1452 = vmatpush1.bf16.msra.mxu0 %v1449
    %1453 = vmatprep.subr.bf16.mxu0 0
    %1454 = vmatpush1.bf16.msra.mxu0 0
    %1455 = vmatprep.subr.bf16.mxu0 0
    %1456 = vmatpush1.bf16.msra.mxu0 0
    %1457 = vmatprep.subr.bf16.mxu0 0
    %1458 = vmatpush1.bf16.msra.mxu0 0
    %1459 = vmatprep.subr.bf16.mxu0 0
    %1460 = vmatpush1.bf16.msra.mxu0 0
    %1461 = vmatprep.subr.bf16.mxu0 0
    %1462 = vmatpush1.bf16.msra.mxu0 0
    %1463 = vmatprep.subr.bf16.mxu0 0
    %1464 = vmatpush1.bf16.msra.mxu0 0
    %1465 = vmatprep.subr.bf16.mxu0 0
    %1466 = vmatpush1.bf16.msra.mxu0 0
    %1467 = vmatprep.subr.bf16.mxu0 0
    %1468 = vmatpush1.bf16.msra.mxu0 0
    %1469 = vmatprep.subr.bf16.mxu0 0
    %1470 = vmatpush1.bf16.msra.mxu0 0
    %1471 = vmatprep.subr.bf16.mxu0 0
    %1472 = vmatpush1.bf16.msra.mxu0 0
    %1473 = vmatprep.subr.bf16.mxu0 0
    %1474 = vmatpush1.bf16.msra.mxu0 0
    %1475 = vmatprep.subr.bf16.mxu0 0
    %1476 = vmatpush1.bf16.msra.mxu0 0
    %1477 = vmatprep.subr.bf16.mxu0 0
    %1478 = vmatpush1.bf16.msra.mxu0 0
    %1479 = vmatprep.subr.bf16.mxu0 0
    %1480 = vmatpush1.bf16.msra.mxu0 0
    %1481 = vmatprep.subr.bf16.mxu0 0
    %1482 = vmatpush1.bf16.msra.mxu0 0
    %1483 = vmatprep.mubr.bf16.mxu0 0
    %1484 = vmatmul.mubr.bf16.gmra.mrb[0].mxu0 %v1446
    %v1485 = vpop.f32.mrb[0].mxu0
    %v1486 = vadd.f32 0.0, %v1485
    %v1487 = vpop.f32.mrb[0].mxu0
    %v1488 = vpop.f32.mrb[0].mxu0
    %v1489 = vpop.f32.mrb[0].mxu0
    %1490 = vdwg.mxu0
    %1492 = vrot.lane.b32.xlu0 %v921, 120
    %v1493 = vpop.permute.xlu0 %1492
    %v1495 = vsel %vm927, %v1386, 0
    %v1498 = vsel %vm1398, %v1493, 0
    %1500 = vmatprep.subr.bf16.mxu0 0
    %1501 = vmatpush1.bf16.msra.mxu0 %v1498
    %1502 = vmatprep.subr.bf16.mxu0 0
    %1503 = vmatpush1.bf16.msra.mxu0 0
    %1504 = vmatprep.subr.bf16.mxu0 0
    %1505 = vmatpush1.bf16.msra.mxu0 0
    %1506 = vmatprep.subr.bf16.mxu0 0
    %1507 = vmatpush1.bf16.msra.mxu0 0
    %1508 = vmatprep.subr.bf16.mxu0 0
    %1509 = vmatpush1.bf16.msra.mxu0 0
    %1510 = vmatprep.subr.bf16.mxu0 0
    %1511 = vmatpush1.bf16.msra.mxu0 0
    %1512 = vmatprep.subr.bf16.mxu0 0
    %1513 = vmatpush1.bf16.msra.mxu0 0
    %1514 = vmatprep.subr.bf16.mxu0 0
    %1515 = vmatpush1.bf16.msra.mxu0 0
    %1516 = vmatprep.subr.bf16.mxu0 0
    %1517 = vmatpush1.bf16.msra.mxu0 0
    %1518 = vmatprep.subr.bf16.mxu0 0
    %1519 = vmatpush1.bf16.msra.mxu0 0
    %1520 = vmatprep.subr.bf16.mxu0 0
    %1521 = vmatpush1.bf16.msra.mxu0 0
    %1522 = vmatprep.subr.bf16.mxu0 0
    %1523 = vmatpush1.bf16.msra.mxu0 0
    %1524 = vmatprep.subr.bf16.mxu0 0
    %1525 = vmatpush1.bf16.msra.mxu0 0
    %1526 = vmatprep.subr.bf16.mxu0 0
    %1527 = vmatpush1.bf16.msra.mxu0 0
    %1528 = vmatprep.subr.bf16.mxu0 0
    %1529 = vmatpush1.bf16.msra.mxu0 0
    %1530 = vmatprep.subr.bf16.mxu0 0
    %1531 = vmatpush1.bf16.msra.mxu0 0
    %1532 = vmatprep.mubr.bf16.mxu0 0
    %1533 = vmatmul.mubr.bf16.gmra.mrb[0].mxu0 %v1495
    %v1534 = vpop.f32.mrb[0].mxu0
    %v1535 = vadd.f32 0.0, %v1534
    %v1536 = vpop.f32.mrb[0].mxu0
    %v1537 = vpop.f32.mrb[0].mxu0
    %v1538 = vpop.f32.mrb[0].mxu0
    %1539 = vdwg.mxu0
    %1541 = vrot.lane.b32.xlu0 %v922, 120
    %v1542 = vpop.permute.xlu0 %1541
    %v1544 = vsel %vm927, %v1387, 0
    %v1547 = vsel %vm1398, %v1542, 0
    %1549 = vmatprep.subr.bf16.mxu0 0
    %1550 = vmatpush1.bf16.msra.mxu0 %v1547
    %1551 = vmatprep.subr.bf16.mxu0 0
    %1552 = vmatpush1.bf16.msra.mxu0 0
    %1553 = vmatprep.subr.bf16.mxu0 0
    %1554 = vmatpush1.bf16.msra.mxu0 0
    %1555 = vmatprep.subr.bf16.mxu0 0
    %1556 = vmatpush1.bf16.msra.mxu0 0
    %1557 = vmatprep.subr.bf16.mxu0 0
    %1558 = vmatpush1.bf16.msra.mxu0 0
    %1559 = vmatprep.subr.bf16.mxu0 0
    %1560 = vmatpush1.bf16.msra.mxu0 0
    %1561 = vmatprep.subr.bf16.mxu0 0
    %1562 = vmatpush1.bf16.msra.mxu0 0
    %1563 = vmatprep.subr.bf16.mxu0 0
    %1564 = vmatpush1.bf16.msra.mxu0 0
    %1565 = vmatprep.subr.bf16.mxu0 0
    %1566 = vmatpush1.bf16.msra.mxu0 0
    %1567 = vmatprep.subr.bf16.mxu0 0
    %1568 = vmatpush1.bf16.msra.mxu0 0
    %1569 = vmatprep.subr.bf16.mxu0 0
    %1570 = vmatpush1.bf16.msra.mxu0 0
    %1571 = vmatprep.subr.bf16.mxu0 0
    %1572 = vmatpush1.bf16.msra.mxu0 0
    %1573 = vmatprep.subr.bf16.mxu0 0
    %1574 = vmatpush1.bf16.msra.mxu0 0
    %1575 = vmatprep.subr.bf16.mxu0 0
    %1576 = vmatpush1.bf16.msra.mxu0 0
    %1577 = vmatprep.subr.bf16.mxu0 0
    %1578 = vmatpush1.bf16.msra.mxu0 0
    %1579 = vmatprep.subr.bf16.mxu0 0
    %1580 = vmatpush1.bf16.msra.mxu0 0
    %1581 = vmatprep.mubr.bf16.mxu0 0
    %1582 = vmatmul.mubr.bf16.gmra.mrb[0].mxu0 %v1544
    %v1583 = vpop.f32.mrb[0].mxu0
    %v1584 = vadd.f32 0.0, %v1583
    %v1585 = vpop.f32.mrb[0].mxu0
    %v1586 = vpop.f32.mrb[0].mxu0
    %v1587 = vpop.f32.mrb[0].mxu0
    %1588 = vdwg.mxu0
    %1590 = vrot.lane.b32.xlu0 %v923, 120
    %v1591 = vpop.permute.xlu0 %1590
    %v1593 = vsel %vm927, %v1388, 0
    %v1596 = vsel %vm1398, %v1591, 0
    %1598 = vmatprep.subr.bf16.mxu0 0
    %1599 = vmatpush1.bf16.msra.mxu0 %v1596
    %1600 = vmatprep.subr.bf16.mxu0 0
    %1601 = vmatpush1.bf16.msra.mxu0 0
    %1602 = vmatprep.subr.bf16.mxu0 0
    %1603 = vmatpush1.bf16.msra.mxu0 0
    %1604 = vmatprep.subr.bf16.mxu0 0
    %1605 = vmatpush1.bf16.msra.mxu0 0
    %1606 = vmatprep.subr.bf16.mxu0 0
    %1607 = vmatpush1.bf16.msra.mxu0 0
    %1608 = vmatprep.subr.bf16.mxu0 0
    %1609 = vmatpush1.bf16.msra.mxu0 0
    %1610 = vmatprep.subr.bf16.mxu0 0
    %1611 = vmatpush1.bf16.msra.mxu0 0
    %1612 = vmatprep.subr.bf16.mxu0 0
    %1613 = vmatpush1.bf16.msra.mxu0 0
    %1614 = vmatprep.subr.bf16.mxu0 0
    %1615 = vmatpush1.bf16.msra.mxu0 0
    %1616 = vmatprep.subr.bf16.mxu0 0
    %1617 = vmatpush1.bf16.msra.mxu0 0
    %1618 = vmatprep.subr.bf16.mxu0 0
    %1619 = vmatpush1.bf16.msra.mxu0 0
    %1620 = vmatprep.subr.bf16.mxu0 0
    %1621 = vmatpush1.bf16.msra.mxu0 0
    %1622 = vmatprep.subr.bf16.mxu0 0
    %1623 = vmatpush1.bf16.msra.mxu0 0
    %1624 = vmatprep.subr.bf16.mxu0 0
    %1625 = vmatpush1.bf16.msra.mxu0 0
    %1626 = vmatprep.subr.bf16.mxu0 0
    %1627 = vmatpush1.bf16.msra.mxu0 0
    %1628 = vmatprep.subr.bf16.mxu0 0
    %1629 = vmatpush1.bf16.msra.mxu0 0
    %1630 = vmatprep.mubr.bf16.mxu0 0
    %1631 = vmatmul.mubr.bf16.gmra.mrb[0].mxu0 %v1593
    %v1632 = vpop.f32.mrb[0].mxu0
    %v1633 = vadd.f32 0.0, %v1632
    %v1634 = vpop.f32.mrb[0].mxu0
    %v1635 = vpop.f32.mrb[0].mxu0
    %v1636 = vpop.f32.mrb[0].mxu0
    %1637 = vdwg.mxu0
    %1639 = vrot.lane.b32.xlu0 %v924, 120
    %v1640 = vpop.permute.xlu0 %1639
    %v1642 = vsel %vm927, %v1389, 0
    %v1645 = vsel %vm1398, %v1640, 0
    %1647 = vmatprep.subr.bf16.mxu0 0
    %1648 = vmatpush1.bf16.msra.mxu0 %v1645
    %1649 = vmatprep.subr.bf16.mxu0 0
    %1650 = vmatpush1.bf16.msra.mxu0 0
    %1651 = vmatprep.subr.bf16.mxu0 0
    %1652 = vmatpush1.bf16.msra.mxu0 0
    %1653 = vmatprep.subr.bf16.mxu0 0
    %1654 = vmatpush1.bf16.msra.mxu0 0
    %1655 = vmatprep.subr.bf16.mxu0 0
    %1656 = vmatpush1.bf16.msra.mxu0 0
    %1657 = vmatprep.subr.bf16.mxu0 0
    %1658 = vmatpush1.bf16.msra.mxu0 0
    %1659 = vmatprep.subr.bf16.mxu0 0
    %1660 = vmatpush1.bf16.msra.mxu0 0
    %1661 = vmatprep.subr.bf16.mxu0 0
    %1662 = vmatpush1.bf16.msra.mxu0 0
    %1663 = vmatprep.subr.bf16.mxu0 0
    %1664 = vmatpush1.bf16.msra.mxu0 0
    %1665 = vmatprep.subr.bf16.mxu0 0
    %1666 = vmatpush1.bf16.msra.mxu0 0
    %1667 = vmatprep.subr.bf16.mxu0 0
    %1668 = vmatpush1.bf16.msra.mxu0 0
    %1669 = vmatprep.subr.bf16.mxu0 0
    %1670 = vmatpush1.bf16.msra.mxu0 0
    %1671 = vmatprep.subr.bf16.mxu0 0
    %1672 = vmatpush1.bf16.msra.mxu0 0
    %1673 = vmatprep.subr.bf16.mxu0 0
    %1674 = vmatpush1.bf16.msra.mxu0 0
    %1675 = vmatprep.subr.bf16.mxu0 0
    %1676 = vmatpush1.bf16.msra.mxu0 0
    %1677 = vmatprep.subr.bf16.mxu0 0
    %1678 = vmatpush1.bf16.msra.mxu0 0
    %1679 = vmatprep.mubr.bf16.mxu0 0
    %1680 = vmatmul.mubr.bf16.gmra.mrb[0].mxu0 %v1642
    %v1681 = vpop.f32.mrb[0].mxu0
    %v1682 = vadd.f32 0.0, %v1681
    %v1683 = vpop.f32.mrb[0].mxu0
    %v1684 = vpop.f32.mrb[0].mxu0
    %v1685 = vpop.f32.mrb[0].mxu0
    %1686 = vdwg.mxu0
    %1688 = vrot.lane.b32.xlu0 %v925, 120
    %v1689 = vpop.permute.xlu0 %1688
    %v1691 = vsel %vm927, %v1390, 0
    %v1694 = vsel %vm1398, %v1689, 0
    %1696 = vmatprep.subr.bf16.mxu0 0
    %1697 = vmatpush1.bf16.msra.mxu0 %v1694
    %1698 = vmatprep.subr.bf16.mxu0 0
    %1699 = vmatpush1.bf16.msra.mxu0 0
    %1700 = vmatprep.subr.bf16.mxu0 0
    %1701 = vmatpush1.bf16.msra.mxu0 0
    %1702 = vmatprep.subr.bf16.mxu0 0
    %1703 = vmatpush1.bf16.msra.mxu0 0
    %1704 = vmatprep.subr.bf16.mxu0 0
    %1705 = vmatpush1.bf16.msra.mxu0 0
    %1706 = vmatprep.subr.bf16.mxu0 0
    %1707 = vmatpush1.bf16.msra.mxu0 0
    %1708 = vmatprep.subr.bf16.mxu0 0
    %1709 = vmatpush1.bf16.msra.mxu0 0
    %1710 = vmatprep.subr.bf16.mxu0 0
    %1711 = vmatpush1.bf16.msra.mxu0 0
    %1712 = vmatprep.subr.bf16.mxu0 0
    %1713 = vmatpush1.bf16.msra.mxu0 0
    %1714 = vmatprep.subr.bf16.mxu0 0
    %1715 = vmatpush1.bf16.msra.mxu0 0
    %1716 = vmatprep.subr.bf16.mxu0 0
    %1717 = vmatpush1.bf16.msra.mxu0 0
    %1718 = vmatprep.subr.bf16.mxu0 0
    %1719 = vmatpush1.bf16.msra.mxu0 0
    %1720 = vmatprep.subr.bf16.mxu0 0
    %1721 = vmatpush1.bf16.msra.mxu0 0
    %1722 = vmatprep.subr.bf16.mxu0 0
    %1723 = vmatpush1.bf16.msra.mxu0 0
    %1724 = vmatprep.subr.bf16.mxu0 0
    %1725 = vmatpush1.bf16.msra.mxu0 0
    %1726 = vmatprep.subr.bf16.mxu0 0
    %1727 = vmatpush1.bf16.msra.mxu0 0
    %1728 = vmatprep.mubr.bf16.mxu0 0
    %1729 = vmatmul.mubr.bf16.gmra.mrb[0].mxu0 %v1691
    %v1730 = vpop.f32.mrb[0].mxu0
    %v1731 = vadd.f32 0.0, %v1730
    %v1732 = vpop.f32.mrb[0].mxu0
    %v1733 = vpop.f32.mrb[0].mxu0
    %v1734 = vpop.f32.mrb[0].mxu0
    %1735 = vdwg.mxu0
    %1737 = vrot.lane.b32.xlu0 %v926, 120
    %v1738 = vpop.permute.xlu0 %1737
    %v1740 = vsel %vm927, %v1391, 0
    %v1743 = vsel %vm1398, %v1738, 0
    %1745 = vmatprep.subr.bf16.mxu0 0
    %1746 = vmatpush1.bf16.msra.mxu0 %v1743
    %1747 = vmatprep.subr.bf16.mxu0 0
    %1748 = vmatpush1.bf16.msra.mxu0 0
    %1749 = vmatprep.subr.bf16.mxu0 0
    %1750 = vmatpush1.bf16.msra.mxu0 0
    %1751 = vmatprep.subr.bf16.mxu0 0
    %1752 = vmatpush1.bf16.msra.mxu0 0
    %1753 = vmatprep.subr.bf16.mxu0 0
    %1754 = vmatpush1.bf16.msra.mxu0 0
    %1755 = vmatprep.subr.bf16.mxu0 0
    %1756 = vmatpush1.bf16.msra.mxu0 0
    %1757 = vmatprep.subr.bf16.mxu0 0
    %1758 = vmatpush1.bf16.msra.mxu0 0
    %1759 = vmatprep.subr.bf16.mxu0 0
    %1760 = vmatpush1.bf16.msra.mxu0 0
    %1761 = vmatprep.subr.bf16.mxu0 0
    %1762 = vmatpush1.bf16.msra.mxu0 0
    %1763 = vmatprep.subr.bf16.mxu0 0
    %1764 = vmatpush1.bf16.msra.mxu0 0
    %1765 = vmatprep.subr.bf16.mxu0 0
    %1766 = vmatpush1.bf16.msra.mxu0 0
    %1767 = vmatprep.subr.bf16.mxu0 0
    %1768 = vmatpush1.bf16.msra.mxu0 0
    %1769 = vmatprep.subr.bf16.mxu0 0
    %1770 = vmatpush1.bf16.msra.mxu0 0
    %1771 = vmatprep.subr.bf16.mxu0 0
    %1772 = vmatpush1.bf16.msra.mxu0 0
    %1773 = vmatprep.subr.bf16.mxu0 0
    %1774 = vmatpush1.bf16.msra.mxu0 0
    %1775 = vmatprep.subr.bf16.mxu0 0
    %1776 = vmatpush1.bf16.msra.mxu0 0
    %1777 = vmatprep.mubr.bf16.mxu0 0
    %1778 = vmatmul.mubr.bf16.gmra.mrb[0].mxu0 %v1740
    %v1779 = vpop.f32.mrb[0].mxu0
    %v1780 = vadd.f32 0.0, %v1779
    %v1781 = vpop.f32.mrb[0].mxu0
    %v1782 = vpop.f32.mrb[0].mxu0
    %v1783 = vpop.f32.mrb[0].mxu0
    %1784 = vdwg.mxu0
    %v1785 = vsel %vm927, %v1376, 0.0
    %v1786 = vsel %vm927, %v1377, 0.0
    %v1787 = vadd.f32 %v1785, %v1786
    %v1788 = vsel %vm927, %v1378, 0.0
    %v1789 = vadd.f32 %v1787, %v1788
    %v1790 = vsel %vm927, %v1379, 0.0
    %v1791 = vadd.f32 %v1789, %v1790
    %v1792 = vsel %vm927, %v1380, 0.0
    %v1793 = vsel %vm927, %v1381, 0.0
    %v1794 = vadd.f32 %v1792, %v1793
    %v1795 = vsel %vm927, %v1382, 0.0
    %v1796 = vadd.f32 %v1794, %v1795
    %v1797 = vsel %vm927, %v1383, 0.0
    %v1798 = vadd.f32 %v1796, %v1797
    %v1799 = vrcp.pop 4.0
    %v1800 = vmul.f32 %v1791, %v1799
    %v1801 = vmul.f32 %v1798, %v1799
    %1802 = vst.msk [vmem:[#allocation4] sm:$0xff] %vm927, %v1800
    %1803 = vst.msk [vmem:[#allocation4 + $0x8] sm:$0xff] %vm927, %v1801
    %v1804 = vld [vmem:[%s7] sm:$0x1]
    %v1806 = vlaneseq
    %v1807 = vshrl.u32 %v1806, 7
    %v1808 = vsub.s32 0, %v1807
    %v1809 = vrot.slane %v1804, %v1808
    %v1811 = vadd.f32 %v1809, 0.0
    %v1812 = vpack.c.bf16 %v1633, %v1437
    %v1813 = vld [vmem:[%s6] sm:$0xf]
    %v1815 = vsel %vm927, %v1812, 0
    %v1818 = vsel %vm1398, %v1813, 0
    %1820 = vmatprep.subr.bf16.mxu0 0
    %1821 = vmatpush1.bf16.msra.mxu0 %v1818
    %1822 = vmatprep.subr.bf16.mxu0 0
    %1823 = vmatpush1.bf16.msra.mxu0 0
    %1824 = vmatprep.subr.bf16.mxu0 0
    %1825 = vmatpush1.bf16.msra.mxu0 0
    %1826 = vmatprep.subr.bf16.mxu0 0
    %1827 = vmatpush1.bf16.msra.mxu0 0
    %1828 = vmatprep.subr.bf16.mxu0 0
    %1829 = vmatpush1.bf16.msra.mxu0 0
    %1830 = vmatprep.subr.bf16.mxu0 0
    %1831 = vmatpush1.bf16.msra.mxu0 0
    %1832 = vmatprep.subr.bf16.mxu0 0
    %1833 = vmatpush1.bf16.msra.mxu0 0
    %1834 = vmatprep.subr.bf16.mxu0 0
    %1835 = vmatpush1.bf16.msra.mxu0 0
    %1836 = vmatprep.subr.bf16.mxu0 0
    %1837 = vmatpush1.bf16.msra.mxu0 0
    %1838 = vmatprep.subr.bf16.mxu0 0
    %1839 = vmatpush1.bf16.msra.mxu0 0
    %1840 = vmatprep.subr.bf16.mxu0 0
    %1841 = vmatpush1.bf16.msra.mxu0 0
    %1842 = vmatprep.subr.bf16.mxu0 0
    %1843 = vmatpush1.bf16.msra.mxu0 0
    %1844 = vmatprep.subr.bf16.mxu0 0
    %1845 = vmatpush1.bf16.msra.mxu0 0
    %1846 = vmatprep.subr.bf16.mxu0 0
    %1847 = vmatpush1.bf16.msra.mxu0 0
    %1848 = vmatprep.subr.bf16.mxu0 0
    %1849 = vmatpush1.bf16.msra.mxu0 0
    %1850 = vmatprep.subr.bf16.mxu0 0
    %1851 = vmatpush1.bf16.msra.mxu0 0
    %1852 = vmatprep.mubr.bf16.mxu0 0
    %1853 = vmatmul.mubr.bf16.gmra.mrb[0].mxu0 %v1815
    %v1854 = vpop.f32.mrb[0].mxu0
    %v1855 = vadd.f32 0.0, %v1854
    %v1856 = vpop.f32.mrb[0].mxu0
    %v1857 = vpop.f32.mrb[0].mxu0
    %v1858 = vadd.f32 0.0, %v1857
    %v1859 = vpop.f32.mrb[0].mxu0
    %1860 = vdwg.mxu0
    %v1861 = vadd.f32 %v1811, %v1855
    %v1862 = vadd.f32 %v1811, %v1858
    %v1863 = vpack.c.bf16 %v1682, %v1486
    %s1864 = scalar_lea.vmem %s6, 4
    %v1865 = vld [vmem:[%s1864] sm:$0xf]
    %v1867 = vsel %vm927, %v1863, 0
    %v1870 = vsel %vm1398, %v1865, 0
    %1872 = vmatprep.subr.bf16.mxu0 0
    %1873 = vmatpush1.bf16.msra.mxu0 %v1870
    %1874 = vmatprep.subr.bf16.mxu0 0
    %1875 = vmatpush1.bf16.msra.mxu0 0
    %1876 = vmatprep.subr.bf16.mxu0 0
    %1877 = vmatpush1.bf16.msra.mxu0 0
    %1878 = vmatprep.subr.bf16.mxu0 0
    %1879 = vmatpush1.bf16.msra.mxu0 0
    %1880 = vmatprep.subr.bf16.mxu0 0
    %1881 = vmatpush1.bf16.msra.mxu0 0
    %1882 = vmatprep.subr.bf16.mxu0 0
    %1883 = vmatpush1.bf16.msra.mxu0 0
    %1884 = vmatprep.subr.bf16.mxu0 0
    %1885 = vmatpush1.bf16.msra.mxu0 0
    %1886 = vmatprep.subr.bf16.mxu0 0
    %1887 = vmatpush1.bf16.msra.mxu0 0
    %1888 = vmatprep.subr.bf16.mxu0 0
    %1889 = vmatpush1.bf16.msra.mxu0 0
    %1890 = vmatprep.subr.bf16.mxu0 0
    %1891 = vmatpush1.bf16.msra.mxu0 0
    %1892 = vmatprep.subr.bf16.mxu0 0
    %1893 = vmatpush1.bf16.msra.mxu0 0
    %1894 = vmatprep.subr.bf16.mxu0 0
    %1895 = vmatpush1.bf16.msra.mxu0 0
    %1896 = vmatprep.subr.bf16.mxu0 0
    %1897 = vmatpush1.bf16.msra.mxu0 0
    %1898 = vmatprep.subr.bf16.mxu0 0
    %1899 = vmatpush1.bf16.msra.mxu0 0
    %1900 = vmatprep.subr.bf16.mxu0 0
    %1901 = vmatpush1.bf16.msra.mxu0 0
    %1902 = vmatprep.subr.bf16.mxu0 0
    %1903 = vmatpush1.bf16.msra.mxu0 0
    %1904 = vmatprep.mubr.bf16.mxu0 0
    %1905 = vmatmul.mubr.bf16.gmra.mrb[0].mxu0 %v1867
    %v1906 = vpop.f32.mrb[0].mxu0
    %v1907 = vadd.f32 0.0, %v1906
    %v1908 = vpop.f32.mrb[0].mxu0
    %v1909 = vpop.f32.mrb[0].mxu0
    %v1910 = vadd.f32 0.0, %v1909
    %v1911 = vpop.f32.mrb[0].mxu0
    %1912 = vdwg.mxu0
    %v1913 = vadd.f32 %v1861, %v1907
    %v1914 = vadd.f32 %v1862, %v1910
    %v1915 = vpack.c.bf16 %v1731, %v1535
    %s1916 = scalar_lea.vmem %s6, 8
    %v1917 = vld [vmem:[%s1916] sm:$0xf]
    %v1919 = vsel %vm927, %v1915, 0
    %v1922 = vsel %vm1398, %v1917, 0
    %1924 = vmatprep.subr.bf16.mxu0 0
    %1925 = vmatpush1.bf16.msra.mxu0 %v1922
    %1926 = vmatprep.subr.bf16.mxu0 0
    %1927 = vmatpush1.bf16.msra.mxu0 0
    %1928 = vmatprep.subr.bf16.mxu0 0
    %1929 = vmatpush1.bf16.msra.mxu0 0
    %1930 = vmatprep.subr.bf16.mxu0 0
    %1931 = vmatpush1.bf16.msra.mxu0 0
    %1932 = vmatprep.subr.bf16.mxu0 0
    %1933 = vmatpush1.bf16.msra.mxu0 0
    %1934 = vmatprep.subr.bf16.mxu0 0
    %1935 = vmatpush1.bf16.msra.mxu0 0
    %1936 = vmatprep.subr.bf16.mxu0 0
    %1937 = vmatpush1.bf16.msra.mxu0 0
    %1938 = vmatprep.subr.bf16.mxu0 0
    %1939 = vmatpush1.bf16.msra.mxu0 0
    %1940 = vmatprep.subr.bf16.mxu0 0
    %1941 = vmatpush1.bf16.msra.mxu0 0
    %1942 = vmatprep.subr.bf16.mxu0 0
    %1943 = vmatpush1.bf16.msra.mxu0 0
    %1944 = vmatprep.subr.bf16.mxu0 0
    %1945 = vmatpush1.bf16.msra.mxu0 0
    %1946 = vmatprep.subr.bf16.mxu0 0
    %1947 = vmatpush1.bf16.msra.mxu0 0
    %1948 = vmatprep.subr.bf16.mxu0 0
    %1949 = vmatpush1.bf16.msra.mxu0 0
    %1950 = vmatprep.subr.bf16.mxu0 0
    %1951 = vmatpush1.bf16.msra.mxu0 0
    %1952 = vmatprep.subr.bf16.mxu0 0
    %1953 = vmatpush1.bf16.msra.mxu0 0
    %1954 = vmatprep.subr.bf16.mxu0 0
    %1955 = vmatpush1.bf16.msra.mxu0 0
    %1956 = vmatprep.mubr.bf16.mxu0 0
    %1957 = vmatmul.mubr.bf16.gmra.mrb[0].mxu0 %v1919
    %v1958 = vpop.f32.mrb[0].mxu0
    %v1959 = vadd.f32 0.0, %v1958
    %v1960 = vpop.f32.mrb[0].mxu0
    %v1961 = vpop.f32.mrb[0].mxu0
    %v1962 = vadd.f32 0.0, %v1961
    %v1963 = vpop.f32.mrb[0].mxu0
    %1964 = vdwg.mxu0
    %v1965 = vadd.f32 %v1913, %v1959
    %v1966 = vadd.f32 %v1914, %v1962
    %v1967 = vpack.c.bf16 %v1780, %v1584
    %s1968 = scalar_lea.vmem %s6, 12
    %v1969 = vld [vmem:[%s1968] sm:$0xf]
    %v1971 = vsel %vm927, %v1967, 0
    %v1974 = vsel %vm1398, %v1969, 0
    %1976 = vmatprep.subr.bf16.mxu0 0
    %1977 = vmatpush1.bf16.msra.mxu0 %v1974
    %1978 = vmatprep.subr.bf16.mxu0 0
    %1979 = vmatpush1.bf16.msra.mxu0 0
    %1980 = vmatprep.subr.bf16.mxu0 0
    %1981 = vmatpush1.bf16.msra.mxu0 0
    %1982 = vmatprep.subr.bf16.mxu0 0
    %1983 = vmatpush1.bf16.msra.mxu0 0
    %1984 = vmatprep.subr.bf16.mxu0 0
    %1985 = vmatpush1.bf16.msra.mxu0 0
    %1986 = vmatprep.subr.bf16.mxu0 0
    %1987 = vmatpush1.bf16.msra.mxu0 0
    %1988 = vmatprep.subr.bf16.mxu0 0
    %1989 = vmatpush1.bf16.msra.mxu0 0
    %1990 = vmatprep.subr.bf16.mxu0 0
    %1991 = vmatpush1.bf16.msra.mxu0 0
    %1992 = vmatprep.subr.bf16.mxu0 0
    %1993 = vmatpush1.bf16.msra.mxu0 0
    %1994 = vmatprep.subr.bf16.mxu0 0
    %1995 = vmatpush1.bf16.msra.mxu0 0
    %1996 = vmatprep.subr.bf16.mxu0 0
    %1997 = vmatpush1.bf16.msra.mxu0 0
    %1998 = vmatprep.subr.bf16.mxu0 0
    %1999 = vmatpush1.bf16.msra.mxu0 0
    %2000 = vmatprep.subr.bf16.mxu0 0
    %2001 = vmatpush1.bf16.msra.mxu0 0
    %2002 = vmatprep.subr.bf16.mxu0 0
    %2003 = vmatpush1.bf16.msra.mxu0 0
    %2004 = vmatprep.subr.bf16.mxu0 0
    %2005 = vmatpush1.bf16.msra.mxu0 0
    %2006 = vmatprep.subr.bf16.mxu0 0
    %2007 = vmatpush1.bf16.msra.mxu0 0
    %2008 = vmatprep.mubr.bf16.mxu0 0
    %2009 = vmatmul.mubr.bf16.gmra.mrb[0].mxu0 %v1971
    %v2010 = vpop.f32.mrb[0].mxu0
    %v2011 = vadd.f32 0.0, %v2010
    %v2012 = vpop.f32.mrb[0].mxu0
    %v2013 = vpop.f32.mrb[0].mxu0
    %v2014 = vadd.f32 0.0, %v2013
    %v2015 = vpop.f32.mrb[0].mxu0
    %2016 = vdwg.mxu0
    %v2017 = vadd.f32 %v1965, %v2011
    %v2018 = vadd.f32 %v1966, %v2014
    %v2019 = vadd.f32 %v58, %v2017
    %v2020 = vadd.f32 %v59, %v2018
    %v2021 = vld [vmem:[%s12] sm:$0x1]
    %v2022 = vld [vmem:[%s13] sm:$0x1]
    %v2023 = vsel %vm142, %v2019, 0.0
    %2024 = vadd.xlane.f32.xlu0 %v2023
    %v2025 = vpop.xlane.xlu0 %2024
    %v2026 = vsel %vm142, %v2020, 0.0
    %2027 = vadd.xlane.f32.xlu0 %v2026
    %v2028 = vpop.xlane.xlu0 %2027
    %v2029 = vrcp.pop 32.0
    %v2030 = vmul.f32 %v2025, %v2029
    %v2031 = vmul.f32 %v2028, %v2029
    %v2032 = vsub.f32 %v2019, %v2030
    %v2033 = vsub.f32 %v2020, %v2031
    %v2034 = vmul.f32 %v2032, %v2032
    %v2035 = vmul.f32 %v2033, %v2033
    %v2036 = vsel %vm142, %v2034, 0.0
    %2037 = vadd.xlane.f32.xlu0 %v2036
    %v2038 = vpop.xlane.xlu0 %2037
    %v2039 = vsel %vm142, %v2035, 0.0
    %2040 = vadd.xlane.f32.xlu0 %v2039
    %v2041 = vpop.xlane.xlu0 %2040
    %v2042 = vmul.f32 %v2038, %v2029
    %v2043 = vmul.f32 %v2041, %v2029
    %v2044 = vadd.f32 %v2042, 1e-05
    %v2045 = vadd.f32 %v2043, 1e-05
    %v2046 = vrsqrt.pop %v2044
    %v2047 = vrsqrt.pop %v2045
    %v2048 = vmul.f32 %v2032, %v2046
    %v2049 = vmul.f32 %v2033, %v2047
    %v2051 = vlaneseq
    %v2052 = vshrl.u32 %v2051, 7
    %v2053 = vsub.s32 0, %v2052
    %v2054 = vrot.slane %v2021, %v2053
    %v2056 = vmul.f32 %v2048, %v2054
    %v2057 = vmul.f32 %v2049, %v2054
    %v2059 = vlaneseq
    %v2060 = vshrl.u32 %v2059, 7
    %v2061 = vsub.s32 0, %v2060
    %v2062 = vrot.slane %v2022, %v2061
    %v2064 = vadd.f32 %v2056, %v2062
    %v2065 = vadd.f32 %v2057, %v2062
    %v2066 = vpack.c.bf16 %v2065, %v2064
    %v2067 = vld [vmem:[%s8] sm:$0xf]
    %v2068 = vld [vmem:[%s8 + $0x4] sm:$0xf]
    %v2069 = vld [vmem:[%s8 + $0x8] sm:$0xf]
    %v2070 = vld [vmem:[%s8 + $0xc] sm:$0xf]
    %v2071 = vld [vmem:[%s9] sm:$0x1]
    %v2073 = vlaneseq
    %v2074 = vshrl.u32 %v2073, 7
    %v2075 = vsub.s32 0, %v2074
    %v2076 = vrot.slane %v2071, %v2075
    %v2082 = vunpack.c.l.b16 %v2067
    %v2083 = vunpack.c.l.b16 %v2068
    %v2084 = vunpack.c.l.b16 %v2069
    %v2085 = vunpack.c.l.b16 %v2070
    %v2086 = vpack.c.b16 %v2083, %v2082
    %v2087 = vpack.c.b16 %v2085, %v2084
    %v2091 = vsel %vm142, %v2066, 0
    %2093 = vmatprep.subr.bf16.mxu0 0
    %2094 = vmatpush1.bf16.msra.mxu0 %v2086
    %2095 = vmatprep.subr.bf16.mxu0 0
    %2096 = vmatpush1.bf16.msra.mxu0 %v2087
    %2097 = vmatprep.subr.bf16.mxu0 0
    %2098 = vmatpush1.bf16.msra.mxu0 0
    %2099 = vmatprep.subr.bf16.mxu0 0
    %2100 = vmatpush1.bf16.msra.mxu0 0
    %2101 = vmatprep.subr.bf16.mxu0 0
    %2102 = vmatpush1.bf16.msra.mxu0 0
    %2103 = vmatprep.subr.bf16.mxu0 0
    %2104 = vmatpush1.bf16.msra.mxu0 0
    %2105 = vmatprep.subr.bf16.mxu0 0
    %2106 = vmatpush1.bf16.msra.mxu0 0
    %2107 = vmatprep.subr.bf16.mxu0 0
    %2108 = vmatpush1.bf16.msra.mxu0 0
    %2109 = vmatprep.subr.bf16.mxu0 0
    %2110 = vmatpush1.bf16.msra.mxu0 0
    %2111 = vmatprep.subr.bf16.mxu0 0
    %2112 = vmatpush1.bf16.msra.mxu0 0
    %2113 = vmatprep.subr.bf16.mxu0 0
    %2114 = vmatpush1.bf16.msra.mxu0 0
    %2115 = vmatprep.subr.bf16.mxu0 0
    %2116 = vmatpush1.bf16.msra.mxu0 0
    %2117 = vmatprep.subr.bf16.mxu0 0
    %2118 = vmatpush1.bf16.msra.mxu0 0
    %2119 = vmatprep.subr.bf16.mxu0 0
    %2120 = vmatpush1.bf16.msra.mxu0 0
    %2121 = vmatprep.subr.bf16.mxu0 0
    %2122 = vmatpush1.bf16.msra.mxu0 0
    %2123 = vmatprep.subr.bf16.mxu0 0
    %2124 = vmatpush1.bf16.msra.mxu0 0
    %2125 = vmatprep.mubr.bf16.mxu0 0
    %2126 = vmatmul.mubr.bf16.gmra.mrb[0].mxu0 %v2091
    %v2127 = vpop.f32.mrb[0].mxu0
    %v2128 = vadd.f32 %v2076, %v2127
    %v2129 = vpop.f32.mrb[0].mxu0
    %v2130 = vpop.f32.mrb[0].mxu0
    %v2131 = vadd.f32 %v2076, %v2130
    %v2132 = vpop.f32.mrb[0].mxu0
    %2133 = vdwg.mxu0
    %v2134 = vmax.f32 %v2128, 0.0
    %v2135 = vmax.f32 %v2131, 0.0
    %v2136 = vpack.c.bf16 %v2135, %v2134
    %v2137 = vld [vmem:[%s10] sm:$0xf]
    %v2138 = vld [vmem:[%s10 + $0x4] sm:$0xf]
    %v2139 = vld [vmem:[%s10 + $0x8] sm:$0xf]
    %v2140 = vld [vmem:[%s10 + $0xc] sm:$0xf]
    %v2141 = vld [vmem:[%s11] sm:$0x1]
    %v2143 = vlaneseq
    %v2144 = vshrl.u32 %v2143, 7
    %v2145 = vsub.s32 0, %v2144
    %v2146 = vrot.slane %v2141, %v2145
    %v2152 = vunpack.c.l.b16 %v2137
    %v2153 = vunpack.c.l.b16 %v2138
    %v2154 = vunpack.c.l.b16 %v2139
    %v2155 = vunpack.c.l.b16 %v2140
    %v2156 = vpack.c.b16 %v2153, %v2152
    %v2157 = vpack.c.b16 %v2155, %v2154
    %v2161 = vsel %vm142, %v2136, 0
    %2163 = vmatprep.subr.bf16.mxu0 0
    %2164 = vmatpush1.bf16.msra.mxu0 %v2156
    %2165 = vmatprep.subr.bf16.mxu0 0
    %2166 = vmatpush1.bf16.msra.mxu0 %v2157
    %2167 = vmatprep.subr.bf16.mxu0 0
    %2168 = vmatpush1.bf16.msra.mxu0 0
    %2169 = vmatprep.subr.bf16.mxu0 0
    %2170 = vmatpush1.bf16.msra.mxu0 0
    %2171 = vmatprep.subr.bf16.mxu0 0
    %2172 = vmatpush1.bf16.msra.mxu0 0
    %2173 = vmatprep.subr.bf16.mxu0 0
    %2174 = vmatpush1.bf16.msra.mxu0 0
    %2175 = vmatprep.subr.bf16.mxu0 0
    %2176 = vmatpush1.bf16.msra.mxu0 0
    %2177 = vmatprep.subr.bf16.mxu0 0
    %2178 = vmatpush1.bf16.msra.mxu0 0
    %2179 = vmatprep.subr.bf16.mxu0 0
    %2180 = vmatpush1.bf16.msra.mxu0 0
    %2181 = vmatprep.subr.bf16.mxu0 0
    %2182 = vmatpush1.bf16.msra.mxu0 0
    %2183 = vmatprep.subr.bf16.mxu0 0
    %2184 = vmatpush1.bf16.msra.mxu0 0
    %2185 = vmatprep.subr.bf16.mxu0 0
    %2186 = vmatpush1.bf16.msra.mxu0 0
    %2187 = vmatprep.subr.bf16.mxu0 0
    %2188 = vmatpush1.bf16.msra.mxu0 0
    %2189 = vmatprep.subr.bf16.mxu0 0
    %2190 = vmatpush1.bf16.msra.mxu0 0
    %2191 = vmatprep.subr.bf16.mxu0 0
    %2192 = vmatpush1.bf16.msra.mxu0 0
    %2193 = vmatprep.subr.bf16.mxu0 0
    %2194 = vmatpush1.bf16.msra.mxu0 0
    %2195 = vmatprep.mubr.bf16.mxu0 0
    %2196 = vmatmul.mubr.bf16.gmra.mrb[0].mxu0 %v2161
    %v2197 = vpop.f32.mrb[0].mxu0
    %v2198 = vadd.f32 %v2146, %v2197
    %v2199 = vpop.f32.mrb[0].mxu0
    %v2200 = vpop.f32.mrb[0].mxu0
    %v2201 = vadd.f32 %v2146, %v2200
    %v2202 = vpop.f32.mrb[0].mxu0
    %2203 = vdwg.mxu0
    %v2204 = vadd.f32 %v2064, %v2198
    %v2205 = vadd.f32 %v2065, %v2201
    %v2206 = vld [vmem:[%s14] sm:$0x1]
    %v2207 = vld [vmem:[%s15] sm:$0x1]
    %v2208 = vsel %vm142, %v2204, 0.0
    %2209 = vadd.xlane.f32.xlu0 %v2208
    %v2210 = vpop.xlane.xlu0 %2209
    %v2211 = vsel %vm142, %v2205, 0.0
    %2212 = vadd.xlane.f32.xlu0 %v2211
    %v2213 = vpop.xlane.xlu0 %2212
    %v2214 = vmul.f32 %v2210, %v2029
    %v2215 = vmul.f32 %v2213, %v2029
    %v2216 = vsub.f32 %v2204, %v2214
    %v2217 = vsub.f32 %v2205, %v2215
    %v2218 = vmul.f32 %v2216, %v2216
    %v2219 = vmul.f32 %v2217, %v2217
    %v2220 = vsel %vm142, %v2218, 0.0
    %2221 = vadd.xlane.f32.xlu0 %v2220
    %v2222 = vpop.xlane.xlu0 %2221
    %v2223 = vsel %vm142, %v2219, 0.0
    %2224 = vadd.xlane.f32.xlu0 %v2223
    %v2225 = vpop.xlane.xlu0 %2224
    %v2226 = vmul.f32 %v2222, %v2029
    %v2227 = vmul.f32 %v2225, %v2029
    %v2228 = vadd.f32 %v2226, 1e-05
    %v2229 = vadd.f32 %v2227, 1e-05
    %v2230 = vrsqrt.pop %v2228
    %v2231 = vrsqrt.pop %v2229
    %v2232 = vmul.f32 %v2216, %v2230
    %v2233 = vmul.f32 %v2217, %v2231
    %v2235 = vlaneseq
    %v2236 = vshrl.u32 %v2235, 7
    %v2237 = vsub.s32 0, %v2236
    %v2238 = vrot.slane %v2206, %v2237
    %v2240 = vmul.f32 %v2232, %v2238
    %v2241 = vmul.f32 %v2233, %v2238
    %v2243 = vlaneseq
    %v2244 = vshrl.u32 %v2243, 7
    %v2245 = vsub.s32 0, %v2244
    %v2246 = vrot.slane %v2207, %v2245
    %v2248 = vadd.f32 %v2240, %v2246
    %v2249 = vadd.f32 %v2241, %v2246
    %2250 = vst.msk [vmem:[#allocation2] sm:$0xff] %vm142, %v2248
    %2251 = vst.msk [vmem:[#allocation2 + $0x8] sm:$0xff] %vm142, %v2249
    // Predicated region
    $region66: #{tpu_custom_call.1} parent=1 // pred_check
      _
    $region67: #{tpu_custom_call.1} parent=1 // pred_check_branch
      %2253 = sbr.rel (0) target = $region69
    $region68: #{tpu_custom_call.1} parent=1 // pred_region
      %s2255 = ssub.s32 256, 256
      %2256 = vsyncadd [#allocation3], %s2255
      %s2257 = sshll.u32 [#allocation2], 4
      %s2258 = int_to_ptr.vmem [resolvable:$true] %s2257
      %2263 = dma.vmem_to_hbm [thread:$0]  %s2258, 256, %s16, [#allocation3], 128, 128, 8
    $region69: #{tpu_custom_call.1} parent=1 // pred_fallthru
      _
    // Predicated region
    $region70: #{tpu_custom_call.1} parent=1 // pred_check
      _
    $region71: #{tpu_custom_call.1} parent=1 // pred_check_branch
      %2265 = sbr.rel (0) target = $region73
    $region72: #{tpu_custom_call.1} parent=1 // pred_region
      %s2267 = ssub.s32 256, 256
      %2268 = vsyncadd [#allocation5], %s2267
      %s2269 = sshll.u32 [#allocation4], 4
      %s2270 = int_to_ptr.vmem [resolvable:$true] %s2269
      %2275 = dma.vmem_to_hbm [thread:$0]  %s2270, 256, %s17, [#allocation5], 128, 128, 8
    $region73: #{tpu_custom_call.1} parent=1 // pred_fallthru
      _
    // Predicated region
    $region74: #{tpu_custom_call.1} parent=1 // pred_check
      _
    $region75: #{tpu_custom_call.1} parent=1 // pred_check_branch
      %2277 = sbr.rel (0) target = $region77
    $region76: #{tpu_custom_call.1} parent=1 // pred_region
      %2278 = dma.done [#allocation3], 256
    $region77: #{tpu_custom_call.1} parent=1 // pred_fallthru
      _
    // Predicated region
    $region78: #{tpu_custom_call.1} parent=1 // pred_check
      _
    $region79: #{tpu_custom_call.1} parent=1 // pred_check_branch
      %2280 = sbr.rel (0) target = $region81
    $region80: #{tpu_custom_call.1} parent=1 // pred_region
      %2281 = dma.done [#allocation5], 256
    $region81: #{tpu_custom_call.1} parent=1 // pred_fallthru
      _
    %2282 = vsyncpa [#allocation3], 1
    %2283 = vsyncpa [#allocation5], 1

</llo_original>
